<compile_context>
chip_gen: v6e
topology: v6e:2x2x1
jax: 0.10.0
libtpu: 0.0.40
codegen_flags: <defaults>
</compile_context>

<pallas_src>
import math

import jax
import jax.numpy as jnp
from jax.experimental import pallas as pl
from jax.experimental.pallas import tpu as pltpu

NUM_CLASSES = 5
LANE = 128            # lane-dense padded FC/output width
NEG_BIG = -1e30       # pad value for fc-bias columns >= NUM_CLASSES


def rnn_kernel(x_ref, w_ih0_ref, w_ihr_ref, w_hh_ref, b_ref,
               fc_w_ref, fc_b_ref, out_ref):
    """Multi-layer tanh RNN (wavefront-scheduled) + Linear + LogSoftmax.

    x_ref:     (seq, input_dim)
    w_ih0_ref: (input_dim, hidden)              layer-0 W_ih, transposed
    w_ihr_ref: (max(L-1,1), hidden, hidden)     W_ih for layers >= 1, transposed
    w_hh_ref:  (L, hidden, hidden)              W_hh, transposed
    b_ref:     (L, hidden)                      b_ih + b_hh folded per layer
    fc_w_ref:  (hidden, LANE)                   fc weight, transposed + zero-padded
    fc_b_ref:  (1, LANE)                        fc bias, cols >= 5 set to NEG_BIG
    out_ref:   (seq, LANE)                      log-probs (first 5 cols valid)
    """
    seq_len = x_ref.shape[0]
    n_layers, _, hidden = w_hh_ref.shape

    # Small operands -> vregs, once.
    b_all = b_ref[...]                                    # (L, hidden)
    w_hh = [w_hh_ref[l] for l in range(n_layers)]         # each (hidden, hidden)
    w_ihr = [w_ihr_ref[l] for l in range(n_layers - 1)]   # layers >= 1

    # Layer-0 input projection for the whole sequence: one MXU matmul with the
    # folded (b_ih + b_hh) bias already added.
    proj0 = (jnp.dot(x_ref[...], w_ih0_ref[...],
                     preferred_element_type=jnp.float32)
             + b_all[0:1, :])                             # (seq, hidden)

    # Wavefront recurrence, fully unrolled (seq + L - 1 waves).  Within a wave
    # each layer reads only previous-wave state, so the per-layer matvecs are
    # independent and the LLO scheduler can overlap them.
    h = [jnp.zeros((1, hidden), jnp.float32) for _ in range(n_layers)]
    top = [None] * seq_len

    for w in range(seq_len + n_layers - 1):
        new_h = list(h)
        for l in range(n_layers):
            t = w - l
            if t < 0 or t >= seq_len:
                continue
            if l == 0:
                pre = proj0[t:t + 1, :]
            else:
                pre = (jnp.dot(h[l - 1], w_ihr[l - 1],
                               preferred_element_type=jnp.float32)
                       + b_all[l:l + 1, :])
            h_new = jnp.tanh(pre + jnp.dot(h[l], w_hh[l],
                                           preferred_element_type=jnp.float32))
            new_h[l] = h_new
            if l == n_layers - 1:
                top[t] = h_new
        h = new_h

    hseq = jnp.concatenate(top, axis=0)                   # (seq, hidden), in vregs

    # Final Linear + LogSoftmax, lane-dense.  Padded logit columns carry the
    # NEG_BIG bias, so they never win the max and exp() underflows them to 0;
    # the softmax over the real 5 columns is unchanged.
    logits = (jnp.dot(hseq, fc_w_ref[...],
                      preferred_element_type=jnp.float32)
              + fc_b_ref[...])                            # (seq, LANE)
    m = jnp.max(logits, axis=-1, keepdims=True)
    z = logits - m
    lse = jnp.log(jnp.sum(jnp.exp(z), axis=-1, keepdims=True))
    out_ref[...] = z - lse                                # single dense store


def rnn_forward(x, kernel_params):
    (w_ih0_t, w_ihr_t, w_hh_t, b_comb, fc_w_pad, fc_b_pad) = kernel_params
    seq_len = x.shape[0]
    out_pad = pl.pallas_call(
        rnn_kernel,
        out_shape=jax.ShapeDtypeStruct((seq_len, LANE), jnp.float32),
        in_specs=[pl.BlockSpec(memory_space=pltpu.MemorySpace.VMEM)] * 7,
        out_specs=pl.BlockSpec(memory_space=pltpu.MemorySpace.VMEM),
    )(x, w_ih0_t, w_ihr_t, w_hh_t, b_comb, fc_w_pad, fc_b_pad)
    # Only the first NUM_CLASSES columns are real log-probabilities.
    return out_pad[:, :NUM_CLASSES]


def init_params(key, input_dim, hidden_dim, n_layers):
    """Deterministic init mimicking PyTorch's U(-1/sqrt(H), 1/sqrt(H))."""
    bound = 1.0 / math.sqrt(hidden_dim)
    keys = jax.random.split(key, 4 * n_layers + 2)

    def u(k, shape):
        return jax.random.uniform(k, shape, jnp.float32, -bound, bound)

    w_ih, w_hh, b_ih, b_hh = [], [], [], []
    for l in range(n_layers):
        in_d = input_dim if l == 0 else hidden_dim
        w_ih.append(u(keys[4 * l + 0], (hidden_dim, in_d)))
        w_hh.append(u(keys[4 * l + 1], (hidden_dim, hidden_dim)))
        b_ih.append(u(keys[4 * l + 2], (hidden_dim,)))
        b_hh.append(u(keys[4 * l + 3], (hidden_dim,)))
    fc_w = u(keys[-2], (NUM_CLASSES, hidden_dim))
    fc_b = u(keys[-1], (NUM_CLASSES,))

    raw = (w_ih, w_hh, b_ih, b_hh, fc_w, fc_b)

    # Kernel-friendly layout: transposed / stacked / bias-folded / lane-padded.
    w_ih0_t = w_ih[0].T                                         # (in, H)
    if n_layers > 1:
        w_ihr_t = jnp.stack([w.T for w in w_ih[1:]], axis=0)    # (L-1, H, H)
    else:
        w_ihr_t = jnp.zeros((1, hidden_dim, hidden_dim), jnp.float32)  # unused
    w_hh_t = jnp.stack([w.T for w in w_hh], axis=0)             # (L, H, H)
    b_comb = jnp.stack([bi + bh for bi, bh in zip(b_ih, b_hh)], axis=0)  # (L, H)
    fc_w_pad = (jnp.zeros((hidden_dim, LANE), jnp.float32)
                .at[:, :NUM_CLASSES].set(fc_w.T))               # (H, 128)
    fc_b_pad = (jnp.full((1, LANE), NEG_BIG, jnp.float32)
                .at[0, :NUM_CLASSES].set(fc_b))                 # (1, 128)

    kernel_params = (w_ih0_t, w_ihr_t, w_hh_t, b_comb, fc_w_pad, fc_b_pad)
    return raw, kernel_params


def rnn_reference(x, raw):
    """Pure-JAX reference replicating torch.nn.RNN (tanh) + Linear + LogSoftmax."""
    w_ih, w_hh, b_ih, b_hh, fc_w, fc_b = raw
    seq = x
    n_layers = len(w_ih)
    hidden = w_hh[0].shape[0]
    for l in range(n_layers):
        h = jnp.zeros((hidden,), jnp.float32)
        outs = []
        for t in range(seq.shape[0]):
            h = jnp.tanh(seq[t] @ w_ih[l].T + b_ih[l] + h @ w_hh[l].T + b_hh[l])
            outs.append(h)
        seq = jnp.stack(outs, axis=0)
    logits = seq @ fc_w.T + fc_b
    return jax.nn.log_softmax(logits, axis=-1)


if __name__ == "__main__":
    seq_len, input_dim, hidden_dim, n_layers = 8, 16, 32, 2

    key = jax.random.PRNGKey(0)
    kx, kp = jax.random.split(key)
    x = jax.random.normal(kx, (seq_len, input_dim), jnp.float32)

    raw_params, kernel_params = init_params(kp, input_dim, hidden_dim, n_layers)

    out = jax.block_until_ready(rnn_forward(x, kernel_params))
    ref = jax.block_until_ready(rnn_reference(x, raw_params))

    assert out.shape == (seq_len, NUM_CLASSES), out.shape
    assert jnp.allclose(out, ref, atol=1e-4, rtol=1e-4), (
        "mismatch vs reference: max abs err = "
        f"{float(jnp.max(jnp.abs(out - ref)))}")

    print("KERNEL_OK")
</pallas_src>

<mosaic_0001>
module attributes {stable_mosaic.version = 11 : i64} {
  func.func @rnn_kernel(%arg0: memref<8x16xf32, #tpu.memory_space<vmem>>, %arg1: memref<16x32xf32, #tpu.memory_space<vmem>>, %arg2: memref<1x32x32xf32, #tpu.memory_space<vmem>>, %arg3: memref<2x32x32xf32, #tpu.memory_space<vmem>>, %arg4: memref<2x32xf32, #tpu.memory_space<vmem>>, %arg5: memref<32x128xf32, #tpu.memory_space<vmem>>, %arg6: memref<1x128xf32, #tpu.memory_space<vmem>>, %arg7: memref<8x128xf32, #tpu.memory_space<vmem>>) attributes {dimension_semantics = [], scalar_prefetch = 0 : i64, scratch_operands = 0 : i64, tpu.core_type = #tpu.core_type<tc>} {
    %c0 = arith.constant 0 : index
    %c0_0 = arith.constant 0 : index
    %0 = vector.load %arg4[%c0, %c0_0] : memref<2x32xf32, #tpu.memory_space<vmem>>, vector<2x32xf32>
    %c0_1 = arith.constant 0 : index
    %c0_2 = arith.constant 0 : index
    %c0_3 = arith.constant 0 : index
    %1 = vector.load %arg3[%c0_1, %c0_2, %c0_3] : memref<2x32x32xf32, #tpu.memory_space<vmem>>, vector<1x32x32xf32>
    %2 = vector.shape_cast %1 : vector<1x32x32xf32> to vector<32x32xf32>
    %c1 = arith.constant 1 : index
    %c0_4 = arith.constant 0 : index
    %c0_5 = arith.constant 0 : index
    %3 = vector.load %arg3[%c1, %c0_4, %c0_5] : memref<2x32x32xf32, #tpu.memory_space<vmem>>, vector<1x32x32xf32>
    %4 = vector.shape_cast %3 : vector<1x32x32xf32> to vector<32x32xf32>
    %c0_6 = arith.constant 0 : index
    %c0_7 = arith.constant 0 : index
    %c0_8 = arith.constant 0 : index
    %5 = vector.load %arg2[%c0_6, %c0_7, %c0_8] : memref<1x32x32xf32, #tpu.memory_space<vmem>>, vector<1x32x32xf32>
    %6 = vector.shape_cast %5 : vector<1x32x32xf32> to vector<32x32xf32>
    %c0_9 = arith.constant 0 : index
    %c0_10 = arith.constant 0 : index
    %7 = vector.load %arg0[%c0_9, %c0_10] : memref<8x16xf32, #tpu.memory_space<vmem>>, vector<8x16xf32>
    %c0_11 = arith.constant 0 : index
    %c0_12 = arith.constant 0 : index
    %8 = vector.load %arg1[%c0_11, %c0_12] : memref<16x32xf32, #tpu.memory_space<vmem>>, vector<16x32xf32>
    %cst = arith.constant dense<0.000000e+00> : vector<8x32xf32>
    %9 = tpu.matmul %7, %8, %cst {dimension_numbers = #tpu.dot_dimension_numbers<[1], [0], [0], [1], [0, 0, 1, 1], [], []>} : vector<8x16xf32>, vector<16x32xf32>, vector<8x32xf32> -> vector<8x32xf32>
    %10 = vector.extract_strided_slice %0 {offsets = [0, 0], sizes = [1, 32], strides = [1, 1]} : vector<2x32xf32> to vector<1x32xf32>
    %11 = vector.broadcast %10 : vector<1x32xf32> to vector<8x32xf32>
    %12 = arith.addf %9, %11 : vector<8x32xf32>
    %cst_13 = arith.constant 0.000000e+00 : f32
    %13 = vector.broadcast %cst_13 : f32 to vector<1x32xf32>
    %cst_14 = arith.constant 0.000000e+00 : f32
    %14 = vector.broadcast %cst_14 : f32 to vector<1x32xf32>
    %15 = vector.extract_strided_slice %12 {offsets = [0, 0], sizes = [1, 32], strides = [1, 1]} : vector<8x32xf32> to vector<1x32xf32>
    %cst_15 = arith.constant dense<0.000000e+00> : vector<1x32xf32>
    %16 = tpu.matmul %13, %2, %cst_15 {dimension_numbers = #tpu.dot_dimension_numbers<[1], [0], [0], [1], [0, 0, 1, 1], [], []>} : vector<1x32xf32>, vector<32x32xf32>, vector<1x32xf32> -> vector<1x32xf32>
    %17 = arith.addf %15, %16 : vector<1x32xf32>
    %18 = math.tanh %17 : vector<1x32xf32>
    %19 = vector.extract_strided_slice %12 {offsets = [1, 0], sizes = [1, 32], strides = [1, 1]} : vector<8x32xf32> to vector<1x32xf32>
    %cst_16 = arith.constant dense<0.000000e+00> : vector<1x32xf32>
    %20 = tpu.matmul %18, %2, %cst_16 {dimension_numbers = #tpu.dot_dimension_numbers<[1], [0], [0], [1], [0, 0, 1, 1], [], []>} : vector<1x32xf32>, vector<32x32xf32>, vector<1x32xf32> -> vector<1x32xf32>
    %21 = arith.addf %19, %20 : vector<1x32xf32>
    %22 = math.tanh %21 : vector<1x32xf32>
    %cst_17 = arith.constant dense<0.000000e+00> : vector<1x32xf32>
    %23 = tpu.matmul %18, %6, %cst_17 {dimension_numbers = #tpu.dot_dimension_numbers<[1], [0], [0], [1], [0, 0, 1, 1], [], []>} : vector<1x32xf32>, vector<32x32xf32>, vector<1x32xf32> -> vector<1x32xf32>
    %24 = vector.extract_strided_slice %0 {offsets = [1, 0], sizes = [1, 32], strides = [1, 1]} : vector<2x32xf32> to vector<1x32xf32>
    %25 = arith.addf %23, %24 : vector<1x32xf32>
    %cst_18 = arith.constant dense<0.000000e+00> : vector<1x32xf32>
    %26 = tpu.matmul %14, %4, %cst_18 {dimension_numbers = #tpu.dot_dimension_numbers<[1], [0], [0], [1], [0, 0, 1, 1], [], []>} : vector<1x32xf32>, vector<32x32xf32>, vector<1x32xf32> -> vector<1x32xf32>
    %27 = arith.addf %25, %26 : vector<1x32xf32>
    %28 = math.tanh %27 : vector<1x32xf32>
    %29 = vector.extract_strided_slice %12 {offsets = [2, 0], sizes = [1, 32], strides = [1, 1]} : vector<8x32xf32> to vector<1x32xf32>
    %cst_19 = arith.constant dense<0.000000e+00> : vector<1x32xf32>
    %30 = tpu.matmul %22, %2, %cst_19 {dimension_numbers = #tpu.dot_dimension_numbers<[1], [0], [0], [1], [0, 0, 1, 1], [], []>} : vector<1x32xf32>, vector<32x32xf32>, vector<1x32xf32> -> vector<1x32xf32>
    %31 = arith.addf %29, %30 : vector<1x32xf32>
    %32 = math.tanh %31 : vector<1x32xf32>
    %cst_20 = arith.constant dense<0.000000e+00> : vector<1x32xf32>
    %33 = tpu.matmul %22, %6, %cst_20 {dimension_numbers = #tpu.dot_dimension_numbers<[1], [0], [0], [1], [0, 0, 1, 1], [], []>} : vector<1x32xf32>, vector<32x32xf32>, vector<1x32xf32> -> vector<1x32xf32>
    %34 = vector.extract_strided_slice %0 {offsets = [1, 0], sizes = [1, 32], strides = [1, 1]} : vector<2x32xf32> to vector<1x32xf32>
    %35 = arith.addf %33, %34 : vector<1x32xf32>
    %cst_21 = arith.constant dense<0.000000e+00> : vector<1x32xf32>
    %36 = tpu.matmul %28, %4, %cst_21 {dimension_numbers = #tpu.dot_dimension_numbers<[1], [0], [0], [1], [0, 0, 1, 1], [], []>} : vector<1x32xf32>, vector<32x32xf32>, vector<1x32xf32> -> vector<1x32xf32>
    %37 = arith.addf %35, %36 : vector<1x32xf32>
    %38 = math.tanh %37 : vector<1x32xf32>
    %39 = vector.extract_strided_slice %12 {offsets = [3, 0], sizes = [1, 32], strides = [1, 1]} : vector<8x32xf32> to vector<1x32xf32>
    %cst_22 = arith.constant dense<0.000000e+00> : vector<1x32xf32>
    %40 = tpu.matmul %32, %2, %cst_22 {dimension_numbers = #tpu.dot_dimension_numbers<[1], [0], [0], [1], [0, 0, 1, 1], [], []>} : vector<1x32xf32>, vector<32x32xf32>, vector<1x32xf32> -> vector<1x32xf32>
    %41 = arith.addf %39, %40 : vector<1x32xf32>
    %42 = math.tanh %41 : vector<1x32xf32>
    %cst_23 = arith.constant dense<0.000000e+00> : vector<1x32xf32>
    %43 = tpu.matmul %32, %6, %cst_23 {dimension_numbers = #tpu.dot_dimension_numbers<[1], [0], [0], [1], [0, 0, 1, 1], [], []>} : vector<1x32xf32>, vector<32x32xf32>, vector<1x32xf32> -> vector<1x32xf32>
    %44 = vector.extract_strided_slice %0 {offsets = [1, 0], sizes = [1, 32], strides = [1, 1]} : vector<2x32xf32> to vector<1x32xf32>
    %45 = arith.addf %43, %44 : vector<1x32xf32>
    %cst_24 = arith.constant dense<0.000000e+00> : vector<1x32xf32>
    %46 = tpu.matmul %38, %4, %cst_24 {dimension_numbers = #tpu.dot_dimension_numbers<[1], [0], [0], [1], [0, 0, 1, 1], [], []>} : vector<1x32xf32>, vector<32x32xf32>, vector<1x32xf32> -> vector<1x32xf32>
    %47 = arith.addf %45, %46 : vector<1x32xf32>
    %48 = math.tanh %47 : vector<1x32xf32>
    %49 = vector.extract_strided_slice %12 {offsets = [4, 0], sizes = [1, 32], strides = [1, 1]} : vector<8x32xf32> to vector<1x32xf32>
    %cst_25 = arith.constant dense<0.000000e+00> : vector<1x32xf32>
    %50 = tpu.matmul %42, %2, %cst_25 {dimension_numbers = #tpu.dot_dimension_numbers<[1], [0], [0], [1], [0, 0, 1, 1], [], []>} : vector<1x32xf32>, vector<32x32xf32>, vector<1x32xf32> -> vector<1x32xf32>
    %51 = arith.addf %49, %50 : vector<1x32xf32>
    %52 = math.tanh %51 : vector<1x32xf32>
    %cst_26 = arith.constant dense<0.000000e+00> : vector<1x32xf32>
    %53 = tpu.matmul %42, %6, %cst_26 {dimension_numbers = #tpu.dot_dimension_numbers<[1], [0], [0], [1], [0, 0, 1, 1], [], []>} : vector<1x32xf32>, vector<32x32xf32>, vector<1x32xf32> -> vector<1x32xf32>
    %54 = vector.extract_strided_slice %0 {offsets = [1, 0], sizes = [1, 32], strides = [1, 1]} : vector<2x32xf32> to vector<1x32xf32>
    %55 = arith.addf %53, %54 : vector<1x32xf32>
    %cst_27 = arith.constant dense<0.000000e+00> : vector<1x32xf32>
    %56 = tpu.matmul %48, %4, %cst_27 {dimension_numbers = #tpu.dot_dimension_numbers<[1], [0], [0], [1], [0, 0, 1, 1], [], []>} : vector<1x32xf32>, vector<32x32xf32>, vector<1x32xf32> -> vector<1x32xf32>
    %57 = arith.addf %55, %56 : vector<1x32xf32>
    %58 = math.tanh %57 : vector<1x32xf32>
    %59 = vector.extract_strided_slice %12 {offsets = [5, 0], sizes = [1, 32], strides = [1, 1]} : vector<8x32xf32> to vector<1x32xf32>
    %cst_28 = arith.constant dense<0.000000e+00> : vector<1x32xf32>
    %60 = tpu.matmul %52, %2, %cst_28 {dimension_numbers = #tpu.dot_dimension_numbers<[1], [0], [0], [1], [0, 0, 1, 1], [], []>} : vector<1x32xf32>, vector<32x32xf32>, vector<1x32xf32> -> vector<1x32xf32>
    %61 = arith.addf %59, %60 : vector<1x32xf32>
    %62 = math.tanh %61 : vector<1x32xf32>
    %cst_29 = arith.constant dense<0.000000e+00> : vector<1x32xf32>
    %63 = tpu.matmul %52, %6, %cst_29 {dimension_numbers = #tpu.dot_dimension_numbers<[1], [0], [0], [1], [0, 0, 1, 1], [], []>} : vector<1x32xf32>, vector<32x32xf32>, vector<1x32xf32> -> vector<1x32xf32>
    %64 = vector.extract_strided_slice %0 {offsets = [1, 0], sizes = [1, 32], strides = [1, 1]} : vector<2x32xf32> to vector<1x32xf32>
    %65 = arith.addf %63, %64 : vector<1x32xf32>
    %cst_30 = arith.constant dense<0.000000e+00> : vector<1x32xf32>
    %66 = tpu.matmul %58, %4, %cst_30 {dimension_numbers = #tpu.dot_dimension_numbers<[1], [0], [0], [1], [0, 0, 1, 1], [], []>} : vector<1x32xf32>, vector<32x32xf32>, vector<1x32xf32> -> vector<1x32xf32>
    %67 = arith.addf %65, %66 : vector<1x32xf32>
    %68 = math.tanh %67 : vector<1x32xf32>
    %69 = vector.extract_strided_slice %12 {offsets = [6, 0], sizes = [1, 32], strides = [1, 1]} : vector<8x32xf32> to vector<1x32xf32>
    %cst_31 = arith.constant dense<0.000000e+00> : vector<1x32xf32>
    %70 = tpu.matmul %62, %2, %cst_31 {dimension_numbers = #tpu.dot_dimension_numbers<[1], [0], [0], [1], [0, 0, 1, 1], [], []>} : vector<1x32xf32>, vector<32x32xf32>, vector<1x32xf32> -> vector<1x32xf32>
    %71 = arith.addf %69, %70 : vector<1x32xf32>
    %72 = math.tanh %71 : vector<1x32xf32>
    %cst_32 = arith.constant dense<0.000000e+00> : vector<1x32xf32>
    %73 = tpu.matmul %62, %6, %cst_32 {dimension_numbers = #tpu.dot_dimension_numbers<[1], [0], [0], [1], [0, 0, 1, 1], [], []>} : vector<1x32xf32>, vector<32x32xf32>, vector<1x32xf32> -> vector<1x32xf32>
    %74 = vector.extract_strided_slice %0 {offsets = [1, 0], sizes = [1, 32], strides = [1, 1]} : vector<2x32xf32> to vector<1x32xf32>
    %75 = arith.addf %73, %74 : vector<1x32xf32>
    %cst_33 = arith.constant dense<0.000000e+00> : vector<1x32xf32>
    %76 = tpu.matmul %68, %4, %cst_33 {dimension_numbers = #tpu.dot_dimension_numbers<[1], [0], [0], [1], [0, 0, 1, 1], [], []>} : vector<1x32xf32>, vector<32x32xf32>, vector<1x32xf32> -> vector<1x32xf32>
    %77 = arith.addf %75, %76 : vector<1x32xf32>
    %78 = math.tanh %77 : vector<1x32xf32>
    %79 = vector.extract_strided_slice %12 {offsets = [7, 0], sizes = [1, 32], strides = [1, 1]} : vector<8x32xf32> to vector<1x32xf32>
    %cst_34 = arith.constant dense<0.000000e+00> : vector<1x32xf32>
    %80 = tpu.matmul %72, %2, %cst_34 {dimension_numbers = #tpu.dot_dimension_numbers<[1], [0], [0], [1], [0, 0, 1, 1], [], []>} : vector<1x32xf32>, vector<32x32xf32>, vector<1x32xf32> -> vector<1x32xf32>
    %81 = arith.addf %79, %80 : vector<1x32xf32>
    %82 = math.tanh %81 : vector<1x32xf32>
    %cst_35 = arith.constant dense<0.000000e+00> : vector<1x32xf32>
    %83 = tpu.matmul %72, %6, %cst_35 {dimension_numbers = #tpu.dot_dimension_numbers<[1], [0], [0], [1], [0, 0, 1, 1], [], []>} : vector<1x32xf32>, vector<32x32xf32>, vector<1x32xf32> -> vector<1x32xf32>
    %84 = vector.extract_strided_slice %0 {offsets = [1, 0], sizes = [1, 32], strides = [1, 1]} : vector<2x32xf32> to vector<1x32xf32>
    %85 = arith.addf %83, %84 : vector<1x32xf32>
    %cst_36 = arith.constant dense<0.000000e+00> : vector<1x32xf32>
    %86 = tpu.matmul %78, %4, %cst_36 {dimension_numbers = #tpu.dot_dimension_numbers<[1], [0], [0], [1], [0, 0, 1, 1], [], []>} : vector<1x32xf32>, vector<32x32xf32>, vector<1x32xf32> -> vector<1x32xf32>
    %87 = arith.addf %85, %86 : vector<1x32xf32>
    %88 = math.tanh %87 : vector<1x32xf32>
    %cst_37 = arith.constant dense<0.000000e+00> : vector<1x32xf32>
    %89 = tpu.matmul %82, %6, %cst_37 {dimension_numbers = #tpu.dot_dimension_numbers<[1], [0], [0], [1], [0, 0, 1, 1], [], []>} : vector<1x32xf32>, vector<32x32xf32>, vector<1x32xf32> -> vector<1x32xf32>
    %90 = vector.extract_strided_slice %0 {offsets = [1, 0], sizes = [1, 32], strides = [1, 1]} : vector<2x32xf32> to vector<1x32xf32>
    %91 = arith.addf %89, %90 : vector<1x32xf32>
    %cst_38 = arith.constant dense<0.000000e+00> : vector<1x32xf32>
    %92 = tpu.matmul %88, %4, %cst_38 {dimension_numbers = #tpu.dot_dimension_numbers<[1], [0], [0], [1], [0, 0, 1, 1], [], []>} : vector<1x32xf32>, vector<32x32xf32>, vector<1x32xf32> -> vector<1x32xf32>
    %93 = arith.addf %91, %92 : vector<1x32xf32>
    %94 = math.tanh %93 : vector<1x32xf32>
    %95 = tpu.concatenate %28, %38, %48, %58, %68, %78, %88, %94 in 0 : vector<1x32xf32>, vector<1x32xf32>, vector<1x32xf32>, vector<1x32xf32>, vector<1x32xf32>, vector<1x32xf32>, vector<1x32xf32>, vector<1x32xf32> -> vector<8x32xf32>
    %c0_39 = arith.constant 0 : index
    %c0_40 = arith.constant 0 : index
    %96 = vector.load %arg5[%c0_39, %c0_40] : memref<32x128xf32, #tpu.memory_space<vmem>>, vector<32x128xf32>
    %cst_41 = arith.constant dense<0.000000e+00> : vector<8x128xf32>
    %97 = tpu.matmul %95, %96, %cst_41 {dimension_numbers = #tpu.dot_dimension_numbers<[1], [0], [0], [1], [0, 0, 1, 1], [], []>} : vector<8x32xf32>, vector<32x128xf32>, vector<8x128xf32> -> vector<8x128xf32>
    %c0_42 = arith.constant 0 : index
    %c0_43 = arith.constant 0 : index
    %98 = vector.load %arg6[%c0_42, %c0_43] : memref<1x128xf32, #tpu.memory_space<vmem>>, vector<1x128xf32>
    %99 = vector.broadcast %98 : vector<1x128xf32> to vector<8x128xf32>
    %100 = arith.addf %97, %99 : vector<8x128xf32>
    %cst_44 = arith.constant dense<0xFF800000> : vector<8xf32>
    %101 = vector.multi_reduction <maximumf>, %100, %cst_44 [1] : vector<8x128xf32> to vector<8xf32>
    %102 = vector.shape_cast %101 : vector<8xf32> to vector<8x1xf32>
    %103 = vector.broadcast %102 : vector<8x1xf32> to vector<8x128xf32>
    %104 = arith.subf %100, %103 : vector<8x128xf32>
    %105 = math.exp %104 : vector<8x128xf32>
    %cst_45 = arith.constant dense<0.000000e+00> : vector<8xf32>
    %106 = vector.multi_reduction <add>, %105, %cst_45 [1] : vector<8x128xf32> to vector<8xf32>
    %107 = vector.shape_cast %106 : vector<8xf32> to vector<8x1xf32>
    %108 = math.log %107 : vector<8x1xf32>
    %109 = vector.broadcast %108 : vector<8x1xf32> to vector<8x128xf32>
    %110 = arith.subf %104, %109 : vector<8x128xf32>
    %c0_46 = arith.constant 0 : index
    %c0_47 = arith.constant 0 : index
    %111 = vector.load %arg7[%c0_46, %c0_47] : memref<8x128xf32, #tpu.memory_space<vmem>>, vector<8x128xf32>
    tpu.vector_store %arg7[%c0_46, %c0_47], %110 {strides = array<i32>} : memref<8x128xf32, #tpu.memory_space<vmem>>, vector<8x128xf32>,
    return
  }
}

</mosaic_0001>

<llo_original>
// kernel: tpu_custom_call.1
$region0: #{tpu_custom_call.1}
  #allocation0 [shape = 'u32[]', space=smem, size = 0x4, offset = 0x4, fixed_abs, tag = 'smem constant byte address 0x4 - core index']
  #allocation1 [shape = 'u32[144,128]{1,0:T(1,128)}', space=vmem, size = 0x12000, scoped, tag = 'internal scratch']
  %s0 = inlined_call_operand.hbm [shape: f32[8,16], index: 0, kind: input, shape index: {}]
  %s1 = inlined_call_operand.hbm [shape: f32[16,32], index: 1, kind: input, shape index: {}]
  %s2 = inlined_call_operand.hbm [shape: f32[1,32,32], index: 2, kind: input, shape index: {}]
  %s3 = inlined_call_operand.hbm [shape: f32[2,32,32], index: 3, kind: input, shape index: {}]
  %s4 = inlined_call_operand.vmem [shape: f32[2,32], index: 4, kind: input, shape index: {}]
  %s5 = inlined_call_operand.hbm [shape: f32[32,128], index: 5, kind: input, shape index: {}]
  %s6 = inlined_call_operand.vmem [shape: f32[1,128], index: 6, kind: input, shape index: {}]
  %s7 = inlined_call_operand.hbm [shape: f32[8,128], index: 7, kind: output, shape index: {}]
  %s8 = sld [smem:[#allocation0]]
  $region58: #{tpu_custom_call.1} parent=0
    _
  %s10 = ssub.s32 1, %s8
  %s11 = scalar_select 0, %s10, %s8
  $region1: #{tpu_custom_call.1} parent=0
    #allocation2 [shape = 'u8[4096]{0}', space=vmem, size = 0x1000, scoped, tag = 'input window, operand 0, single buffered']
    #allocation3 [shape = 's32[1]{0}', space=sflag, size = 0x4, scoped, tag = 'scoped memory for tpu_custom_call.1']
    #allocation4 [shape = 's32[1]{0}', space=sflag, size = 0x4, scoped, tag = 'scoped memory for tpu_custom_call.1']
    #allocation5 [shape = 'u8[8192]{0}', space=vmem, size = 0x2000, scoped, tag = 'input window, operand 1, single buffered']
    #allocation6 [shape = 's32[1]{0}', space=sflag, size = 0x4, scoped, tag = 'scoped memory for tpu_custom_call.1']
    #allocation7 [shape = 'u8[16384]{0}', space=vmem, size = 0x4000, scoped, tag = 'input window, operand 2, single buffered']
    #allocation8 [shape = 'u8[32768]{0}', space=vmem, size = 0x8000, scoped, tag = 'input window, operand 3, single buffered']
    #allocation9 [shape = 's32[1]{0}', space=sflag, size = 0x4, scoped, tag = 'scoped memory for tpu_custom_call.1']
    #allocation10 [shape = 'u8[16384]{0}', space=vmem, size = 0x4000, scoped, tag = 'input window, operand 5, single buffered']
    #allocation11 [shape = 'u8[4096]{0}', space=vmem, size = 0x1000, scoped, tag = 'output window, operand 0, single buffered']
    %12 = vsyncpa [#allocation3], 0
    %13 = vsyncpa [#allocation6], 0
    %14 = vsyncpa [#allocation9], 0
    %15 = vsyncpa [#allocation4], 0
    // Predicated region
    $region2: #{tpu_custom_call.1} parent=1 // pred_check
      _
    $region3: #{tpu_custom_call.1} parent=1 // pred_check_branch
      %17 = sbr.rel (0) target = $region5
    $region4: #{tpu_custom_call.1} parent=1 // pred_region
      %s19 = ssub.s32 128, 128
      %20 = vsyncadd [#allocation3], %s19
      %s22 = sshll.u32 [#allocation2], 4
      %s23 = int_to_ptr.vmem [resolvable:$true] %s22
      %25 = dma.hbm_to_vmem [thread:$0]  %s0, 128, %s23, [#allocation3]
    $region5: #{tpu_custom_call.1} parent=1 // pred_fallthru
      _
    // Predicated region
    $region6: #{tpu_custom_call.1} parent=1 // pred_check
      _
    $region7: #{tpu_custom_call.1} parent=1 // pred_check_branch
      %27 = sbr.rel (0) target = $region9
    $region8: #{tpu_custom_call.1} parent=1 // pred_region
      %s29 = ssub.s32 256, 256
      %30 = vsyncadd [#allocation6], %s29
      %s31 = sshll.u32 [#allocation5], 4
      %s32 = int_to_ptr.vmem [resolvable:$true] %s31
      %37 = dma.hbm_to_vmem [thread:$0]  %s1, 256, %s32, [#allocation6], 128, 128, 8
    $region9: #{tpu_custom_call.1} parent=1 // pred_fallthru
      _
    // Predicated region
    $region10: #{tpu_custom_call.1} parent=1 // pred_check
      _
    $region11: #{tpu_custom_call.1} parent=1 // pred_check_branch
      %39 = sbr.rel (0) target = $region13
    $region12: #{tpu_custom_call.1} parent=1 // pred_region
      %s41 = ssub.s32 512, 512
      %42 = vsyncadd [#allocation6], %s41
      %s43 = sshll.u32 [#allocation7], 4
      %s44 = int_to_ptr.vmem [resolvable:$true] %s43
      %49 = dma.hbm_to_vmem [thread:$0]  %s2, 512, %s44, [#allocation6], 128, 128, 8
    $region13: #{tpu_custom_call.1} parent=1 // pred_fallthru
      _
    // Predicated region
    $region14: #{tpu_custom_call.1} parent=1 // pred_check
      _
    $region15: #{tpu_custom_call.1} parent=1 // pred_check_branch
      %51 = sbr.rel (0) target = $region17
    $region16: #{tpu_custom_call.1} parent=1 // pred_region
      %s53 = ssub.s32 1024, 1024
      %54 = vsyncadd [#allocation9], %s53
      %s55 = sshll.u32 [#allocation8], 4
      %s56 = int_to_ptr.vmem [resolvable:$true] %s55
      %61 = dma.hbm_to_vmem [thread:$0]  %s3, 1024, %s56, [#allocation9], 128, 128, 8
    $region17: #{tpu_custom_call.1} parent=1 // pred_fallthru
      _
    // Predicated region
    $region18: #{tpu_custom_call.1} parent=1 // pred_check
      _
    $region19: #{tpu_custom_call.1} parent=1 // pred_check_branch
      %63 = sbr.rel (0) target = $region21
    $region20: #{tpu_custom_call.1} parent=1 // pred_region
      _
    $region21: #{tpu_custom_call.1} parent=1 // pred_fallthru
      _
    // Predicated region
    $region22: #{tpu_custom_call.1} parent=1 // pred_check
      _
    $region23: #{tpu_custom_call.1} parent=1 // pred_check_branch
      %65 = sbr.rel (0) target = $region25
    $region24: #{tpu_custom_call.1} parent=1 // pred_region
      %s67 = ssub.s32 512, 512
      %68 = vsyncadd [#allocation9], %s67
      %s69 = sshll.u32 [#allocation10], 4
      %s70 = int_to_ptr.vmem [resolvable:$true] %s69
      %75 = dma.hbm_to_vmem [thread:$0]  %s5, 512, %s70, [#allocation9], 128, 128, 8
    $region25: #{tpu_custom_call.1} parent=1 // pred_fallthru
      _
    // Predicated region
    $region26: #{tpu_custom_call.1} parent=1 // pred_check
      _
    $region27: #{tpu_custom_call.1} parent=1 // pred_check_branch
      %77 = sbr.rel (0) target = $region29
    $region28: #{tpu_custom_call.1} parent=1 // pred_region
      _
    $region29: #{tpu_custom_call.1} parent=1 // pred_fallthru
      _
    // Predicated region
    $region30: #{tpu_custom_call.1} parent=1 // pred_check
      _
    $region31: #{tpu_custom_call.1} parent=1 // pred_check_branch
      %79 = sbr.rel (0) target = $region33
    $region32: #{tpu_custom_call.1} parent=1 // pred_region
      %80 = dma.done [#allocation3], 128
    $region33: #{tpu_custom_call.1} parent=1 // pred_fallthru
      _
    // Predicated region
    $region34: #{tpu_custom_call.1} parent=1 // pred_check
      _
    $region35: #{tpu_custom_call.1} parent=1 // pred_check_branch
      %82 = sbr.rel (0) target = $region37
    $region36: #{tpu_custom_call.1} parent=1 // pred_region
      %83 = dma.done [#allocation6], 256
    $region37: #{tpu_custom_call.1} parent=1 // pred_fallthru
      _
    // Predicated region
    $region38: #{tpu_custom_call.1} parent=1 // pred_check
      _
    $region39: #{tpu_custom_call.1} parent=1 // pred_check_branch
      %85 = sbr.rel (0) target = $region41
    $region40: #{tpu_custom_call.1} parent=1 // pred_region
      %86 = dma.done [#allocation6], 512
    $region41: #{tpu_custom_call.1} parent=1 // pred_fallthru
      _
    // Predicated region
    $region42: #{tpu_custom_call.1} parent=1 // pred_check
      _
    $region43: #{tpu_custom_call.1} parent=1 // pred_check_branch
      %88 = sbr.rel (0) target = $region45
    $region44: #{tpu_custom_call.1} parent=1 // pred_region
      %89 = dma.done [#allocation9], 1024
    $region45: #{tpu_custom_call.1} parent=1 // pred_fallthru
      _
    // Predicated region
    $region46: #{tpu_custom_call.1} parent=1 // pred_check
      _
    $region47: #{tpu_custom_call.1} parent=1 // pred_check_branch
      %91 = sbr.rel (0) target = $region49
    $region48: #{tpu_custom_call.1} parent=1 // pred_region
      %92 = dma.done [#allocation9], 512
    $region49: #{tpu_custom_call.1} parent=1 // pred_fallthru
      _
    %v93 = vld [vmem:[%s4] sm:$0x3]
    %v94 = vld [vmem:[#allocation8] sm:$0xff]
    %v95 = vld [vmem:[#allocation8 + $0x8] sm:$0xff]
    %v96 = vld [vmem:[#allocation8 + $0x10] sm:$0xff]
    %v97 = vld [vmem:[#allocation8 + $0x18] sm:$0xff]
    %s98 = scalar_lea.vmem [#allocation8], 32
    %v99 = vld [vmem:[%s98] sm:$0xff]
    %v100 = vld [vmem:[%s98 + $0x8] sm:$0xff]
    %v101 = vld [vmem:[%s98 + $0x10] sm:$0xff]
    %v102 = vld [vmem:[%s98 + $0x18] sm:$0xff]
    %v103 = vld [vmem:[#allocation7] sm:$0xff]
    %v104 = vld [vmem:[#allocation7 + $0x8] sm:$0xff]
    %v105 = vld [vmem:[#allocation7 + $0x10] sm:$0xff]
    %v106 = vld [vmem:[#allocation7 + $0x18] sm:$0xff]
    %v107 = vld [vmem:[#allocation2] sm:$0xff]
    %v108 = vld [vmem:[#allocation5] sm:$0xff]
    %v109 = vld [vmem:[#allocation5 + $0x8] sm:$0xff]
    %v110 = vlaneseq
    %v111 = vshrl.u32 %v110, 7
    %v112 = vsub.s32 0, %v111
    %v113 = vrot.slane %v93, %v112
    %vm114 = vcmask 130048
    %v116 = vsel %vm114, %v107, 0
    %118 = vmatprep.subr.mxu0 0.0
    %119 = vmatpush1.msra.mxu0 0.0
    %120 = vmatprep.subr.mxu0 0.0
    %121 = vmatpush1.msra.mxu0 0.0
    %122 = vmatprep.subr.mxu0 0.0
    %123 = vmatpush1.msra.mxu0 0.0
    %124 = vmatprep.subr.mxu0 0.0
    %125 = vmatpush1.msra.mxu0 0.0
    %126 = vmatprep.subr.mxu0 0.0
    %127 = vmatpush1.msra.mxu0 0.0
    %128 = vmatprep.subr.mxu0 0.0
    %129 = vmatpush1.msra.mxu0 0.0
    %130 = vmatprep.subr.mxu0 0.0
    %131 = vmatpush1.msra.mxu0 0.0
    %132 = vmatprep.subr.mxu0 0.0
    %133 = vmatpush1.msra.mxu0 0.0
    %134 = vmatprep.subr.mxu0 0.0
    %135 = vmatpush1.msra.mxu0 0.0
    %136 = vmatprep.subr.mxu0 0.0
    %137 = vmatpush1.msra.mxu0 0.0
    %138 = vmatprep.subr.mxu0 0.0
    %139 = vmatpush1.msra.mxu0 0.0
    %140 = vmatprep.subr.mxu0 0.0
    %141 = vmatpush1.msra.mxu0 0.0
    %142 = vmatprep.subr.mxu0 0.0
    %143 = vmatpush1.msra.mxu0 0.0
    %144 = vmatprep.subr.mxu0 0.0
    %145 = vmatpush1.msra.mxu0 0.0
    %146 = vmatprep.subr.mxu0 0.0
    %147 = vmatpush1.msra.mxu0 %v109
    %148 = vmatprep.subr.mxu0 0.0
    %149 = vmatpush1.msra.mxu0 %v108
    %150 = vmatprep.subr.mxu0 0.0
    %151 = vmatpush2.msra.mxu0 0.0
    %152 = vmatprep.subr.mxu0 0.0
    %153 = vmatpush2.msra.mxu0 0.0
    %154 = vmatprep.subr.mxu0 0.0
    %155 = vmatpush2.msra.mxu0 0.0
    %156 = vmatprep.subr.mxu0 0.0
    %157 = vmatpush2.msra.mxu0 0.0
    %158 = vmatprep.subr.mxu0 0.0
    %159 = vmatpush2.msra.mxu0 0.0
    %160 = vmatprep.subr.mxu0 0.0
    %161 = vmatpush2.msra.mxu0 0.0
    %162 = vmatprep.subr.mxu0 0.0
    %163 = vmatpush2.msra.mxu0 0.0
    %164 = vmatprep.subr.mxu0 0.0
    %165 = vmatpush2.msra.mxu0 0.0
    %166 = vmatprep.subr.mxu0 0.0
    %167 = vmatpush2.msra.mxu0 0.0
    %168 = vmatprep.subr.mxu0 0.0
    %169 = vmatpush2.msra.mxu0 0.0
    %170 = vmatprep.subr.mxu0 0.0
    %171 = vmatpush2.msra.mxu0 0.0
    %172 = vmatprep.subr.mxu0 0.0
    %173 = vmatpush2.msra.mxu0 0.0
    %174 = vmatprep.subr.mxu0 0.0
    %175 = vmatpush2.msra.mxu0 0.0
    %176 = vmatprep.subr.mxu0 0.0
    %177 = vmatpush2.msra.mxu0 0.0
    %178 = vmatprep.subr.mxu0 0.0
    %179 = vmatpush2.msra.mxu0 0.0
    %180 = vmatprep.subr.mxu0 0.0
    %181 = vmatpush2.msra.mxu0 0.0
    %182 = vmatprep.mubr.f32.mxu0 0.0
    %183 = vmatmul.mubr.f32.gmra.mxu0 %v116
    %v184 = vpop.f32.mrf.mxu0
    %v185 = vadd.f32 %v113, %v184
    %v186 = vpop.f32.mrf.mxu0
    %187 = vdwg.mxu0
    %vm188 = vcmask 261120
    %v190 = vsel %vm188, 0.0, 0
    %192 = vmatprep.subr.mxu0 0.0
    %193 = vmatpush1.msra.mxu0 0.0
    %194 = vmatprep.subr.mxu0 0.0
    %195 = vmatpush1.msra.mxu0 0.0
    %196 = vmatprep.subr.mxu0 0.0
    %197 = vmatpush1.msra.mxu0 0.0
    %198 = vmatprep.subr.mxu0 0.0
    %199 = vmatpush1.msra.mxu0 0.0
    %200 = vmatprep.subr.mxu0 0.0
    %201 = vmatpush1.msra.mxu0 0.0
    %202 = vmatprep.subr.mxu0 0.0
    %203 = vmatpush1.msra.mxu0 0.0
    %204 = vmatprep.subr.mxu0 0.0
    %205 = vmatpush1.msra.mxu0 0.0
    %206 = vmatprep.subr.mxu0 0.0
    %207 = vmatpush1.msra.mxu0 0.0
    %208 = vmatprep.subr.mxu0 0.0
    %209 = vmatpush1.msra.mxu0 0.0
    %210 = vmatprep.subr.mxu0 0.0
    %211 = vmatpush1.msra.mxu0 0.0
    %212 = vmatprep.subr.mxu0 0.0
    %213 = vmatpush1.msra.mxu0 0.0
    %214 = vmatprep.subr.mxu0 0.0
    %215 = vmatpush1.msra.mxu0 0.0
    %216 = vmatprep.subr.mxu0 0.0
    %217 = vmatpush1.msra.mxu0 %v97
    %218 = vmatprep.subr.mxu0 0.0
    %219 = vmatpush1.msra.mxu0 %v96
    %220 = vmatprep.subr.mxu0 0.0
    %221 = vmatpush1.msra.mxu0 %v95
    %222 = vmatprep.subr.mxu0 0.0
    %223 = vmatpush1.msra.mxu0 %v94
    %224 = vmatprep.subr.mxu0 0.0
    %225 = vmatpush2.msra.mxu0 0.0
    %226 = vmatprep.subr.mxu0 0.0
    %227 = vmatpush2.msra.mxu0 0.0
    %228 = vmatprep.subr.mxu0 0.0
    %229 = vmatpush2.msra.mxu0 0.0
    %230 = vmatprep.subr.mxu0 0.0
    %231 = vmatpush2.msra.mxu0 0.0
    %232 = vmatprep.subr.mxu0 0.0
    %233 = vmatpush2.msra.mxu0 0.0
    %234 = vmatprep.subr.mxu0 0.0
    %235 = vmatpush2.msra.mxu0 0.0
    %236 = vmatprep.subr.mxu0 0.0
    %237 = vmatpush2.msra.mxu0 0.0
    %238 = vmatprep.subr.mxu0 0.0
    %239 = vmatpush2.msra.mxu0 0.0
    %240 = vmatprep.subr.mxu0 0.0
    %241 = vmatpush2.msra.mxu0 0.0
    %242 = vmatprep.subr.mxu0 0.0
    %243 = vmatpush2.msra.mxu0 0.0
    %244 = vmatprep.subr.mxu0 0.0
    %245 = vmatpush2.msra.mxu0 0.0
    %246 = vmatprep.subr.mxu0 0.0
    %247 = vmatpush2.msra.mxu0 0.0
    %248 = vmatprep.subr.mxu0 0.0
    %249 = vmatpush2.msra.mxu0 0.0
    %250 = vmatprep.subr.mxu0 0.0
    %251 = vmatpush2.msra.mxu0 0.0
    %252 = vmatprep.subr.mxu0 0.0
    %253 = vmatpush2.msra.mxu0 0.0
    %254 = vmatprep.subr.mxu0 0.0
    %255 = vmatpush2.msra.mxu0 0.0
    %256 = vmatprep.mubr.f32.mxu0 0.0
    %257 = vmatmul.mubr.f32.gmra.mxu0 %v190
    %v258 = vpop.f32.mrf.mxu0
    %v259 = vadd.f32 0.0, %v258
    %v260 = vpop.f32.mrf.mxu0
    %261 = vdwg.mxu0
    %v262 = vadd.f32 %v185, %v259
    %v263 = vtanh.pop %v262
    %v265 = vsel %vm188, %v263, 0
    %267 = vmatprep.subr.mxu0 0.0
    %268 = vmatpush1.msra.mxu0 0.0
    %269 = vmatprep.subr.mxu0 0.0
    %270 = vmatpush1.msra.mxu0 0.0
    %271 = vmatprep.subr.mxu0 0.0
    %272 = vmatpush1.msra.mxu0 0.0
    %273 = vmatprep.subr.mxu0 0.0
    %274 = vmatpush1.msra.mxu0 0.0
    %275 = vmatprep.subr.mxu0 0.0
    %276 = vmatpush1.msra.mxu0 0.0
    %277 = vmatprep.subr.mxu0 0.0
    %278 = vmatpush1.msra.mxu0 0.0
    %279 = vmatprep.subr.mxu0 0.0
    %280 = vmatpush1.msra.mxu0 0.0
    %281 = vmatprep.subr.mxu0 0.0
    %282 = vmatpush1.msra.mxu0 0.0
    %283 = vmatprep.subr.mxu0 0.0
    %284 = vmatpush1.msra.mxu0 0.0
    %285 = vmatprep.subr.mxu0 0.0
    %286 = vmatpush1.msra.mxu0 0.0
    %287 = vmatprep.subr.mxu0 0.0
    %288 = vmatpush1.msra.mxu0 0.0
    %289 = vmatprep.subr.mxu0 0.0
    %290 = vmatpush1.msra.mxu0 0.0
    %291 = vmatprep.subr.mxu0 0.0
    %292 = vmatpush1.msra.mxu0 %v97
    %293 = vmatprep.subr.mxu0 0.0
    %294 = vmatpush1.msra.mxu0 %v96
    %295 = vmatprep.subr.mxu0 0.0
    %296 = vmatpush1.msra.mxu0 %v95
    %297 = vmatprep.subr.mxu0 0.0
    %298 = vmatpush1.msra.mxu0 %v94
    %299 = vmatprep.subr.mxu0 0.0
    %300 = vmatpush2.msra.mxu0 0.0
    %301 = vmatprep.subr.mxu0 0.0
    %302 = vmatpush2.msra.mxu0 0.0
    %303 = vmatprep.subr.mxu0 0.0
    %304 = vmatpush2.msra.mxu0 0.0
    %305 = vmatprep.subr.mxu0 0.0
    %306 = vmatpush2.msra.mxu0 0.0
    %307 = vmatprep.subr.mxu0 0.0
    %308 = vmatpush2.msra.mxu0 0.0
    %309 = vmatprep.subr.mxu0 0.0
    %310 = vmatpush2.msra.mxu0 0.0
    %311 = vmatprep.subr.mxu0 0.0
    %312 = vmatpush2.msra.mxu0 0.0
    %313 = vmatprep.subr.mxu0 0.0
    %314 = vmatpush2.msra.mxu0 0.0
    %315 = vmatprep.subr.mxu0 0.0
    %316 = vmatpush2.msra.mxu0 0.0
    %317 = vmatprep.subr.mxu0 0.0
    %318 = vmatpush2.msra.mxu0 0.0
    %319 = vmatprep.subr.mxu0 0.0
    %320 = vmatpush2.msra.mxu0 0.0
    %321 = vmatprep.subr.mxu0 0.0
    %322 = vmatpush2.msra.mxu0 0.0
    %323 = vmatprep.subr.mxu0 0.0
    %324 = vmatpush2.msra.mxu0 0.0
    %325 = vmatprep.subr.mxu0 0.0
    %326 = vmatpush2.msra.mxu0 0.0
    %327 = vmatprep.subr.mxu0 0.0
    %328 = vmatpush2.msra.mxu0 0.0
    %329 = vmatprep.subr.mxu0 0.0
    %330 = vmatpush2.msra.mxu0 0.0
    %331 = vmatprep.mubr.f32.mxu0 0.0
    %332 = vmatmul.mubr.f32.gmra.mxu0 %v265
    %v333 = vpop.f32.mrf.mxu0
    %v334 = vadd.f32 0.0, %v333
    %v335 = vpop.f32.mrf.mxu0
    %336 = vdwg.mxu0
    %v338 = vrot.slane %v334, 7
    %v340 = vadd.f32 %v185, %v338
    %v341 = vtanh.pop %v340
    %v343 = vrot.slane %v93, 1
    %345 = vmatprep.subr.mxu0 0.0
    %346 = vmatpush1.msra.mxu0 0.0
    %347 = vmatprep.subr.mxu0 0.0
    %348 = vmatpush1.msra.mxu0 0.0
    %349 = vmatprep.subr.mxu0 0.0
    %350 = vmatpush1.msra.mxu0 0.0
    %351 = vmatprep.subr.mxu0 0.0
    %352 = vmatpush1.msra.mxu0 0.0
    %353 = vmatprep.subr.mxu0 0.0
    %354 = vmatpush1.msra.mxu0 0.0
    %355 = vmatprep.subr.mxu0 0.0
    %356 = vmatpush1.msra.mxu0 0.0
    %357 = vmatprep.subr.mxu0 0.0
    %358 = vmatpush1.msra.mxu0 0.0
    %359 = vmatprep.subr.mxu0 0.0
    %360 = vmatpush1.msra.mxu0 0.0
    %361 = vmatprep.subr.mxu0 0.0
    %362 = vmatpush1.msra.mxu0 0.0
    %363 = vmatprep.subr.mxu0 0.0
    %364 = vmatpush1.msra.mxu0 0.0
    %365 = vmatprep.subr.mxu0 0.0
    %366 = vmatpush1.msra.mxu0 0.0
    %367 = vmatprep.subr.mxu0 0.0
    %368 = vmatpush1.msra.mxu0 0.0
    %369 = vmatprep.subr.mxu0 0.0
    %370 = vmatpush1.msra.mxu0 %v106
    %371 = vmatprep.subr.mxu0 0.0
    %372 = vmatpush1.msra.mxu0 %v105
    %373 = vmatprep.subr.mxu0 0.0
    %374 = vmatpush1.msra.mxu0 %v104
    %375 = vmatprep.subr.mxu0 0.0
    %376 = vmatpush1.msra.mxu0 %v103
    %377 = vmatprep.subr.mxu0 0.0
    %378 = vmatpush2.msra.mxu0 0.0
    %379 = vmatprep.subr.mxu0 0.0
    %380 = vmatpush2.msra.mxu0 0.0
    %381 = vmatprep.subr.mxu0 0.0
    %382 = vmatpush2.msra.mxu0 0.0
    %383 = vmatprep.subr.mxu0 0.0
    %384 = vmatpush2.msra.mxu0 0.0
    %385 = vmatprep.subr.mxu0 0.0
    %386 = vmatpush2.msra.mxu0 0.0
    %387 = vmatprep.subr.mxu0 0.0
    %388 = vmatpush2.msra.mxu0 0.0
    %389 = vmatprep.subr.mxu0 0.0
    %390 = vmatpush2.msra.mxu0 0.0
    %391 = vmatprep.subr.mxu0 0.0
    %392 = vmatpush2.msra.mxu0 0.0
    %393 = vmatprep.subr.mxu0 0.0
    %394 = vmatpush2.msra.mxu0 0.0
    %395 = vmatprep.subr.mxu0 0.0
    %396 = vmatpush2.msra.mxu0 0.0
    %397 = vmatprep.subr.mxu0 0.0
    %398 = vmatpush2.msra.mxu0 0.0
    %399 = vmatprep.subr.mxu0 0.0
    %400 = vmatpush2.msra.mxu0 0.0
    %401 = vmatprep.subr.mxu0 0.0
    %402 = vmatpush2.msra.mxu0 0.0
    %403 = vmatprep.subr.mxu0 0.0
    %404 = vmatpush2.msra.mxu0 0.0
    %405 = vmatprep.subr.mxu0 0.0
    %406 = vmatpush2.msra.mxu0 0.0
    %407 = vmatprep.subr.mxu0 0.0
    %408 = vmatpush2.msra.mxu0 0.0
    %409 = vmatprep.mubr.f32.mxu0 0.0
    %410 = vmatmul.mubr.f32.gmra.mxu0 %v265
    %v411 = vpop.f32.mrf.mxu0
    %v412 = vadd.f32 %v343, %v411
    %v413 = vpop.f32.mrf.mxu0
    %414 = vdwg.mxu0
    %415 = vmatprep.subr.mxu0 0.0
    %416 = vmatpush1.msra.mxu0 0.0
    %417 = vmatprep.subr.mxu0 0.0
    %418 = vmatpush1.msra.mxu0 0.0
    %419 = vmatprep.subr.mxu0 0.0
    %420 = vmatpush1.msra.mxu0 0.0
    %421 = vmatprep.subr.mxu0 0.0
    %422 = vmatpush1.msra.mxu0 0.0
    %423 = vmatprep.subr.mxu0 0.0
    %424 = vmatpush1.msra.mxu0 0.0
    %425 = vmatprep.subr.mxu0 0.0
    %426 = vmatpush1.msra.mxu0 0.0
    %427 = vmatprep.subr.mxu0 0.0
    %428 = vmatpush1.msra.mxu0 0.0
    %429 = vmatprep.subr.mxu0 0.0
    %430 = vmatpush1.msra.mxu0 0.0
    %431 = vmatprep.subr.mxu0 0.0
    %432 = vmatpush1.msra.mxu0 0.0
    %433 = vmatprep.subr.mxu0 0.0
    %434 = vmatpush1.msra.mxu0 0.0
    %435 = vmatprep.subr.mxu0 0.0
    %436 = vmatpush1.msra.mxu0 0.0
    %437 = vmatprep.subr.mxu0 0.0
    %438 = vmatpush1.msra.mxu0 0.0
    %439 = vmatprep.subr.mxu0 0.0
    %440 = vmatpush1.msra.mxu0 %v102
    %441 = vmatprep.subr.mxu0 0.0
    %442 = vmatpush1.msra.mxu0 %v101
    %443 = vmatprep.subr.mxu0 0.0
    %444 = vmatpush1.msra.mxu0 %v100
    %445 = vmatprep.subr.mxu0 0.0
    %446 = vmatpush1.msra.mxu0 %v99
    %447 = vmatprep.subr.mxu0 0.0
    %448 = vmatpush2.msra.mxu0 0.0
    %449 = vmatprep.subr.mxu0 0.0
    %450 = vmatpush2.msra.mxu0 0.0
    %451 = vmatprep.subr.mxu0 0.0
    %452 = vmatpush2.msra.mxu0 0.0
    %453 = vmatprep.subr.mxu0 0.0
    %454 = vmatpush2.msra.mxu0 0.0
    %455 = vmatprep.subr.mxu0 0.0
    %456 = vmatpush2.msra.mxu0 0.0
    %457 = vmatprep.subr.mxu0 0.0
    %458 = vmatpush2.msra.mxu0 0.0
    %459 = vmatprep.subr.mxu0 0.0
    %460 = vmatpush2.msra.mxu0 0.0
    %461 = vmatprep.subr.mxu0 0.0
    %462 = vmatpush2.msra.mxu0 0.0
    %463 = vmatprep.subr.mxu0 0.0
    %464 = vmatpush2.msra.mxu0 0.0
    %465 = vmatprep.subr.mxu0 0.0
    %466 = vmatpush2.msra.mxu0 0.0
    %467 = vmatprep.subr.mxu0 0.0
    %468 = vmatpush2.msra.mxu0 0.0
    %469 = vmatprep.subr.mxu0 0.0
    %470 = vmatpush2.msra.mxu0 0.0
    %471 = vmatprep.subr.mxu0 0.0
    %472 = vmatpush2.msra.mxu0 0.0
    %473 = vmatprep.subr.mxu0 0.0
    %474 = vmatpush2.msra.mxu0 0.0
    %475 = vmatprep.subr.mxu0 0.0
    %476 = vmatpush2.msra.mxu0 0.0
    %477 = vmatprep.subr.mxu0 0.0
    %478 = vmatpush2.msra.mxu0 0.0
    %479 = vmatprep.mubr.f32.mxu0 0.0
    %480 = vmatmul.mubr.f32.gmra.mxu0 %v190
    %v481 = vpop.f32.mrf.mxu0
    %v482 = vadd.f32 0.0, %v481
    %v483 = vpop.f32.mrf.mxu0
    %484 = vdwg.mxu0
    %v485 = vadd.f32 %v412, %v482
    %v486 = vtanh.pop %v485
    %v488 = vrot.slane %v341, 1
    %v489 = vsel %vm188, %v488, 0
    %491 = vmatprep.subr.mxu0 0.0
    %492 = vmatpush1.msra.mxu0 0.0
    %493 = vmatprep.subr.mxu0 0.0
    %494 = vmatpush1.msra.mxu0 0.0
    %495 = vmatprep.subr.mxu0 0.0
    %496 = vmatpush1.msra.mxu0 0.0
    %497 = vmatprep.subr.mxu0 0.0
    %498 = vmatpush1.msra.mxu0 0.0
    %499 = vmatprep.subr.mxu0 0.0
    %500 = vmatpush1.msra.mxu0 0.0
    %501 = vmatprep.subr.mxu0 0.0
    %502 = vmatpush1.msra.mxu0 0.0
    %503 = vmatprep.subr.mxu0 0.0
    %504 = vmatpush1.msra.mxu0 0.0
    %505 = vmatprep.subr.mxu0 0.0
    %506 = vmatpush1.msra.mxu0 0.0
    %507 = vmatprep.subr.mxu0 0.0
    %508 = vmatpush1.msra.mxu0 0.0
    %509 = vmatprep.subr.mxu0 0.0
    %510 = vmatpush1.msra.mxu0 0.0
    %511 = vmatprep.subr.mxu0 0.0
    %512 = vmatpush1.msra.mxu0 0.0
    %513 = vmatprep.subr.mxu0 0.0
    %514 = vmatpush1.msra.mxu0 0.0
    %515 = vmatprep.subr.mxu0 0.0
    %516 = vmatpush1.msra.mxu0 %v97
    %517 = vmatprep.subr.mxu0 0.0
    %518 = vmatpush1.msra.mxu0 %v96
    %519 = vmatprep.subr.mxu0 0.0
    %520 = vmatpush1.msra.mxu0 %v95
    %521 = vmatprep.subr.mxu0 0.0
    %522 = vmatpush1.msra.mxu0 %v94
    %523 = vmatprep.subr.mxu0 0.0
    %524 = vmatpush2.msra.mxu0 0.0
    %525 = vmatprep.subr.mxu0 0.0
    %526 = vmatpush2.msra.mxu0 0.0
    %527 = vmatprep.subr.mxu0 0.0
    %528 = vmatpush2.msra.mxu0 0.0
    %529 = vmatprep.subr.mxu0 0.0
    %530 = vmatpush2.msra.mxu0 0.0
    %531 = vmatprep.subr.mxu0 0.0
    %532 = vmatpush2.msra.mxu0 0.0
    %533 = vmatprep.subr.mxu0 0.0
    %534 = vmatpush2.msra.mxu0 0.0
    %535 = vmatprep.subr.mxu0 0.0
    %536 = vmatpush2.msra.mxu0 0.0
    %537 = vmatprep.subr.mxu0 0.0
    %538 = vmatpush2.msra.mxu0 0.0
    %539 = vmatprep.subr.mxu0 0.0
    %540 = vmatpush2.msra.mxu0 0.0
    %541 = vmatprep.subr.mxu0 0.0
    %542 = vmatpush2.msra.mxu0 0.0
    %543 = vmatprep.subr.mxu0 0.0
    %544 = vmatpush2.msra.mxu0 0.0
    %545 = vmatprep.subr.mxu0 0.0
    %546 = vmatpush2.msra.mxu0 0.0
    %547 = vmatprep.subr.mxu0 0.0
    %548 = vmatpush2.msra.mxu0 0.0
    %549 = vmatprep.subr.mxu0 0.0
    %550 = vmatpush2.msra.mxu0 0.0
    %551 = vmatprep.subr.mxu0 0.0
    %552 = vmatpush2.msra.mxu0 0.0
    %553 = vmatprep.subr.mxu0 0.0
    %554 = vmatpush2.msra.mxu0 0.0
    %555 = vmatprep.mubr.f32.mxu0 0.0
    %556 = vmatmul.mubr.f32.gmra.mxu0 %v489
    %v557 = vpop.f32.mrf.mxu0
    %v558 = vadd.f32 0.0, %v557
    %v559 = vpop.f32.mrf.mxu0
    %560 = vdwg.mxu0
    %v562 = vrot.slane %v558, 6
    %v564 = vadd.f32 %v185, %v562
    %v565 = vtanh.pop %v564
    %566 = vmatprep.subr.mxu0 0.0
    %567 = vmatpush1.msra.mxu0 0.0
    %568 = vmatprep.subr.mxu0 0.0
    %569 = vmatpush1.msra.mxu0 0.0
    %570 = vmatprep.subr.mxu0 0.0
    %571 = vmatpush1.msra.mxu0 0.0
    %572 = vmatprep.subr.mxu0 0.0
    %573 = vmatpush1.msra.mxu0 0.0
    %574 = vmatprep.subr.mxu0 0.0
    %575 = vmatpush1.msra.mxu0 0.0
    %576 = vmatprep.subr.mxu0 0.0
    %577 = vmatpush1.msra.mxu0 0.0
    %578 = vmatprep.subr.mxu0 0.0
    %579 = vmatpush1.msra.mxu0 0.0
    %580 = vmatprep.subr.mxu0 0.0
    %581 = vmatpush1.msra.mxu0 0.0
    %582 = vmatprep.subr.mxu0 0.0
    %583 = vmatpush1.msra.mxu0 0.0
    %584 = vmatprep.subr.mxu0 0.0
    %585 = vmatpush1.msra.mxu0 0.0
    %586 = vmatprep.subr.mxu0 0.0
    %587 = vmatpush1.msra.mxu0 0.0
    %588 = vmatprep.subr.mxu0 0.0
    %589 = vmatpush1.msra.mxu0 0.0
    %590 = vmatprep.subr.mxu0 0.0
    %591 = vmatpush1.msra.mxu0 %v106
    %592 = vmatprep.subr.mxu0 0.0
    %593 = vmatpush1.msra.mxu0 %v105
    %594 = vmatprep.subr.mxu0 0.0
    %595 = vmatpush1.msra.mxu0 %v104
    %596 = vmatprep.subr.mxu0 0.0
    %597 = vmatpush1.msra.mxu0 %v103
    %598 = vmatprep.subr.mxu0 0.0
    %599 = vmatpush2.msra.mxu0 0.0
    %600 = vmatprep.subr.mxu0 0.0
    %601 = vmatpush2.msra.mxu0 0.0
    %602 = vmatprep.subr.mxu0 0.0
    %603 = vmatpush2.msra.mxu0 0.0
    %604 = vmatprep.subr.mxu0 0.0
    %605 = vmatpush2.msra.mxu0 0.0
    %606 = vmatprep.subr.mxu0 0.0
    %607 = vmatpush2.msra.mxu0 0.0
    %608 = vmatprep.subr.mxu0 0.0
    %609 = vmatpush2.msra.mxu0 0.0
    %610 = vmatprep.subr.mxu0 0.0
    %611 = vmatpush2.msra.mxu0 0.0
    %612 = vmatprep.subr.mxu0 0.0
    %613 = vmatpush2.msra.mxu0 0.0
    %614 = vmatprep.subr.mxu0 0.0
    %615 = vmatpush2.msra.mxu0 0.0
    %616 = vmatprep.subr.mxu0 0.0
    %617 = vmatpush2.msra.mxu0 0.0
    %618 = vmatprep.subr.mxu0 0.0
    %619 = vmatpush2.msra.mxu0 0.0
    %620 = vmatprep.subr.mxu0 0.0
    %621 = vmatpush2.msra.mxu0 0.0
    %622 = vmatprep.subr.mxu0 0.0
    %623 = vmatpush2.msra.mxu0 0.0
    %624 = vmatprep.subr.mxu0 0.0
    %625 = vmatpush2.msra.mxu0 0.0
    %626 = vmatprep.subr.mxu0 0.0
    %627 = vmatpush2.msra.mxu0 0.0
    %628 = vmatprep.subr.mxu0 0.0
    %629 = vmatpush2.msra.mxu0 0.0
    %630 = vmatprep.mubr.f32.mxu0 0.0
    %631 = vmatmul.mubr.f32.gmra.mxu0 %v489
    %v632 = vpop.f32.mrf.mxu0
    %v633 = vadd.f32 %v343, %v632
    %v634 = vpop.f32.mrf.mxu0
    %635 = vdwg.mxu0
    %v637 = vsel %vm188, %v486, 0
    %639 = vmatprep.subr.mxu0 0.0
    %640 = vmatpush1.msra.mxu0 0.0
    %641 = vmatprep.subr.mxu0 0.0
    %642 = vmatpush1.msra.mxu0 0.0
    %643 = vmatprep.subr.mxu0 0.0
    %644 = vmatpush1.msra.mxu0 0.0
    %645 = vmatprep.subr.mxu0 0.0
    %646 = vmatpush1.msra.mxu0 0.0
    %647 = vmatprep.subr.mxu0 0.0
    %648 = vmatpush1.msra.mxu0 0.0
    %649 = vmatprep.subr.mxu0 0.0
    %650 = vmatpush1.msra.mxu0 0.0
    %651 = vmatprep.subr.mxu0 0.0
    %652 = vmatpush1.msra.mxu0 0.0
    %653 = vmatprep.subr.mxu0 0.0
    %654 = vmatpush1.msra.mxu0 0.0
    %655 = vmatprep.subr.mxu0 0.0
    %656 = vmatpush1.msra.mxu0 0.0
    %657 = vmatprep.subr.mxu0 0.0
    %658 = vmatpush1.msra.mxu0 0.0
    %659 = vmatprep.subr.mxu0 0.0
    %660 = vmatpush1.msra.mxu0 0.0
    %661 = vmatprep.subr.mxu0 0.0
    %662 = vmatpush1.msra.mxu0 0.0
    %663 = vmatprep.subr.mxu0 0.0
    %664 = vmatpush1.msra.mxu0 %v102
    %665 = vmatprep.subr.mxu0 0.0
    %666 = vmatpush1.msra.mxu0 %v101
    %667 = vmatprep.subr.mxu0 0.0
    %668 = vmatpush1.msra.mxu0 %v100
    %669 = vmatprep.subr.mxu0 0.0
    %670 = vmatpush1.msra.mxu0 %v99
    %671 = vmatprep.subr.mxu0 0.0
    %672 = vmatpush2.msra.mxu0 0.0
    %673 = vmatprep.subr.mxu0 0.0
    %674 = vmatpush2.msra.mxu0 0.0
    %675 = vmatprep.subr.mxu0 0.0
    %676 = vmatpush2.msra.mxu0 0.0
    %677 = vmatprep.subr.mxu0 0.0
    %678 = vmatpush2.msra.mxu0 0.0
    %679 = vmatprep.subr.mxu0 0.0
    %680 = vmatpush2.msra.mxu0 0.0
    %681 = vmatprep.subr.mxu0 0.0
    %682 = vmatpush2.msra.mxu0 0.0
    %683 = vmatprep.subr.mxu0 0.0
    %684 = vmatpush2.msra.mxu0 0.0
    %685 = vmatprep.subr.mxu0 0.0
    %686 = vmatpush2.msra.mxu0 0.0
    %687 = vmatprep.subr.mxu0 0.0
    %688 = vmatpush2.msra.mxu0 0.0
    %689 = vmatprep.subr.mxu0 0.0
    %690 = vmatpush2.msra.mxu0 0.0
    %691 = vmatprep.subr.mxu0 0.0
    %692 = vmatpush2.msra.mxu0 0.0
    %693 = vmatprep.subr.mxu0 0.0
    %694 = vmatpush2.msra.mxu0 0.0
    %695 = vmatprep.subr.mxu0 0.0
    %696 = vmatpush2.msra.mxu0 0.0
    %697 = vmatprep.subr.mxu0 0.0
    %698 = vmatpush2.msra.mxu0 0.0
    %699 = vmatprep.subr.mxu0 0.0
    %700 = vmatpush2.msra.mxu0 0.0
    %701 = vmatprep.subr.mxu0 0.0
    %702 = vmatpush2.msra.mxu0 0.0
    %703 = vmatprep.mubr.f32.mxu0 0.0
    %704 = vmatmul.mubr.f32.gmra.mxu0 %v637
    %v705 = vpop.f32.mrf.mxu0
    %v706 = vadd.f32 0.0, %v705
    %v707 = vpop.f32.mrf.mxu0
    %708 = vdwg.mxu0
    %v709 = vadd.f32 %v633, %v706
    %v710 = vtanh.pop %v709
    %v712 = vrot.slane %v565, 2
    %v713 = vsel %vm188, %v712, 0
    %715 = vmatprep.subr.mxu0 0.0
    %716 = vmatpush1.msra.mxu0 0.0
    %717 = vmatprep.subr.mxu0 0.0
    %718 = vmatpush1.msra.mxu0 0.0
    %719 = vmatprep.subr.mxu0 0.0
    %720 = vmatpush1.msra.mxu0 0.0
    %721 = vmatprep.subr.mxu0 0.0
    %722 = vmatpush1.msra.mxu0 0.0
    %723 = vmatprep.subr.mxu0 0.0
    %724 = vmatpush1.msra.mxu0 0.0
    %725 = vmatprep.subr.mxu0 0.0
    %726 = vmatpush1.msra.mxu0 0.0
    %727 = vmatprep.subr.mxu0 0.0
    %728 = vmatpush1.msra.mxu0 0.0
    %729 = vmatprep.subr.mxu0 0.0
    %730 = vmatpush1.msra.mxu0 0.0
    %731 = vmatprep.subr.mxu0 0.0
    %732 = vmatpush1.msra.mxu0 0.0
    %733 = vmatprep.subr.mxu0 0.0
    %734 = vmatpush1.msra.mxu0 0.0
    %735 = vmatprep.subr.mxu0 0.0
    %736 = vmatpush1.msra.mxu0 0.0
    %737 = vmatprep.subr.mxu0 0.0
    %738 = vmatpush1.msra.mxu0 0.0
    %739 = vmatprep.subr.mxu0 0.0
    %740 = vmatpush1.msra.mxu0 %v97
    %741 = vmatprep.subr.mxu0 0.0
    %742 = vmatpush1.msra.mxu0 %v96
    %743 = vmatprep.subr.mxu0 0.0
    %744 = vmatpush1.msra.mxu0 %v95
    %745 = vmatprep.subr.mxu0 0.0
    %746 = vmatpush1.msra.mxu0 %v94
    %747 = vmatprep.subr.mxu0 0.0
    %748 = vmatpush2.msra.mxu0 0.0
    %749 = vmatprep.subr.mxu0 0.0
    %750 = vmatpush2.msra.mxu0 0.0
    %751 = vmatprep.subr.mxu0 0.0
    %752 = vmatpush2.msra.mxu0 0.0
    %753 = vmatprep.subr.mxu0 0.0
    %754 = vmatpush2.msra.mxu0 0.0
    %755 = vmatprep.subr.mxu0 0.0
    %756 = vmatpush2.msra.mxu0 0.0
    %757 = vmatprep.subr.mxu0 0.0
    %758 = vmatpush2.msra.mxu0 0.0
    %759 = vmatprep.subr.mxu0 0.0
    %760 = vmatpush2.msra.mxu0 0.0
    %761 = vmatprep.subr.mxu0 0.0
    %762 = vmatpush2.msra.mxu0 0.0
    %763 = vmatprep.subr.mxu0 0.0
    %764 = vmatpush2.msra.mxu0 0.0
    %765 = vmatprep.subr.mxu0 0.0
    %766 = vmatpush2.msra.mxu0 0.0
    %767 = vmatprep.subr.mxu0 0.0
    %768 = vmatpush2.msra.mxu0 0.0
    %769 = vmatprep.subr.mxu0 0.0
    %770 = vmatpush2.msra.mxu0 0.0
    %771 = vmatprep.subr.mxu0 0.0
    %772 = vmatpush2.msra.mxu0 0.0
    %773 = vmatprep.subr.mxu0 0.0
    %774 = vmatpush2.msra.mxu0 0.0
    %775 = vmatprep.subr.mxu0 0.0
    %776 = vmatpush2.msra.mxu0 0.0
    %777 = vmatprep.subr.mxu0 0.0
    %778 = vmatpush2.msra.mxu0 0.0
    %779 = vmatprep.mubr.f32.mxu0 0.0
    %780 = vmatmul.mubr.f32.gmra.mxu0 %v713
    %v781 = vpop.f32.mrf.mxu0
    %v782 = vadd.f32 0.0, %v781
    %v783 = vpop.f32.mrf.mxu0
    %784 = vdwg.mxu0
    %v786 = vrot.slane %v782, 5
    %v788 = vadd.f32 %v185, %v786
    %v789 = vtanh.pop %v788
    %790 = vmatprep.subr.mxu0 0.0
    %791 = vmatpush1.msra.mxu0 0.0
    %792 = vmatprep.subr.mxu0 0.0
    %793 = vmatpush1.msra.mxu0 0.0
    %794 = vmatprep.subr.mxu0 0.0
    %795 = vmatpush1.msra.mxu0 0.0
    %796 = vmatprep.subr.mxu0 0.0
    %797 = vmatpush1.msra.mxu0 0.0
    %798 = vmatprep.subr.mxu0 0.0
    %799 = vmatpush1.msra.mxu0 0.0
    %800 = vmatprep.subr.mxu0 0.0
    %801 = vmatpush1.msra.mxu0 0.0
    %802 = vmatprep.subr.mxu0 0.0
    %803 = vmatpush1.msra.mxu0 0.0
    %804 = vmatprep.subr.mxu0 0.0
    %805 = vmatpush1.msra.mxu0 0.0
    %806 = vmatprep.subr.mxu0 0.0
    %807 = vmatpush1.msra.mxu0 0.0
    %808 = vmatprep.subr.mxu0 0.0
    %809 = vmatpush1.msra.mxu0 0.0
    %810 = vmatprep.subr.mxu0 0.0
    %811 = vmatpush1.msra.mxu0 0.0
    %812 = vmatprep.subr.mxu0 0.0
    %813 = vmatpush1.msra.mxu0 0.0
    %814 = vmatprep.subr.mxu0 0.0
    %815 = vmatpush1.msra.mxu0 %v106
    %816 = vmatprep.subr.mxu0 0.0
    %817 = vmatpush1.msra.mxu0 %v105
    %818 = vmatprep.subr.mxu0 0.0
    %819 = vmatpush1.msra.mxu0 %v104
    %820 = vmatprep.subr.mxu0 0.0
    %821 = vmatpush1.msra.mxu0 %v103
    %822 = vmatprep.subr.mxu0 0.0
    %823 = vmatpush2.msra.mxu0 0.0
    %824 = vmatprep.subr.mxu0 0.0
    %825 = vmatpush2.msra.mxu0 0.0
    %826 = vmatprep.subr.mxu0 0.0
    %827 = vmatpush2.msra.mxu0 0.0
    %828 = vmatprep.subr.mxu0 0.0
    %829 = vmatpush2.msra.mxu0 0.0
    %830 = vmatprep.subr.mxu0 0.0
    %831 = vmatpush2.msra.mxu0 0.0
    %832 = vmatprep.subr.mxu0 0.0
    %833 = vmatpush2.msra.mxu0 0.0
    %834 = vmatprep.subr.mxu0 0.0
    %835 = vmatpush2.msra.mxu0 0.0
    %836 = vmatprep.subr.mxu0 0.0
    %837 = vmatpush2.msra.mxu0 0.0
    %838 = vmatprep.subr.mxu0 0.0
    %839 = vmatpush2.msra.mxu0 0.0
    %840 = vmatprep.subr.mxu0 0.0
    %841 = vmatpush2.msra.mxu0 0.0
    %842 = vmatprep.subr.mxu0 0.0
    %843 = vmatpush2.msra.mxu0 0.0
    %844 = vmatprep.subr.mxu0 0.0
    %845 = vmatpush2.msra.mxu0 0.0
    %846 = vmatprep.subr.mxu0 0.0
    %847 = vmatpush2.msra.mxu0 0.0
    %848 = vmatprep.subr.mxu0 0.0
    %849 = vmatpush2.msra.mxu0 0.0
    %850 = vmatprep.subr.mxu0 0.0
    %851 = vmatpush2.msra.mxu0 0.0
    %852 = vmatprep.subr.mxu0 0.0
    %853 = vmatpush2.msra.mxu0 0.0
    %854 = vmatprep.mubr.f32.mxu0 0.0
    %855 = vmatmul.mubr.f32.gmra.mxu0 %v713
    %v856 = vpop.f32.mrf.mxu0
    %v857 = vadd.f32 %v343, %v856
    %v858 = vpop.f32.mrf.mxu0
    %859 = vdwg.mxu0
    %v861 = vsel %vm188, %v710, 0
    %863 = vmatprep.subr.mxu0 0.0
    %864 = vmatpush1.msra.mxu0 0.0
    %865 = vmatprep.subr.mxu0 0.0
    %866 = vmatpush1.msra.mxu0 0.0
    %867 = vmatprep.subr.mxu0 0.0
    %868 = vmatpush1.msra.mxu0 0.0
    %869 = vmatprep.subr.mxu0 0.0
    %870 = vmatpush1.msra.mxu0 0.0
    %871 = vmatprep.subr.mxu0 0.0
    %872 = vmatpush1.msra.mxu0 0.0
    %873 = vmatprep.subr.mxu0 0.0
    %874 = vmatpush1.msra.mxu0 0.0
    %875 = vmatprep.subr.mxu0 0.0
    %876 = vmatpush1.msra.mxu0 0.0
    %877 = vmatprep.subr.mxu0 0.0
    %878 = vmatpush1.msra.mxu0 0.0
    %879 = vmatprep.subr.mxu0 0.0
    %880 = vmatpush1.msra.mxu0 0.0
    %881 = vmatprep.subr.mxu0 0.0
    %882 = vmatpush1.msra.mxu0 0.0
    %883 = vmatprep.subr.mxu0 0.0
    %884 = vmatpush1.msra.mxu0 0.0
    %885 = vmatprep.subr.mxu0 0.0
    %886 = vmatpush1.msra.mxu0 0.0
    %887 = vmatprep.subr.mxu0 0.0
    %888 = vmatpush1.msra.mxu0 %v102
    %889 = vmatprep.subr.mxu0 0.0
    %890 = vmatpush1.msra.mxu0 %v101
    %891 = vmatprep.subr.mxu0 0.0
    %892 = vmatpush1.msra.mxu0 %v100
    %893 = vmatprep.subr.mxu0 0.0
    %894 = vmatpush1.msra.mxu0 %v99
    %895 = vmatprep.subr.mxu0 0.0
    %896 = vmatpush2.msra.mxu0 0.0
    %897 = vmatprep.subr.mxu0 0.0
    %898 = vmatpush2.msra.mxu0 0.0
    %899 = vmatprep.subr.mxu0 0.0
    %900 = vmatpush2.msra.mxu0 0.0
    %901 = vmatprep.subr.mxu0 0.0
    %902 = vmatpush2.msra.mxu0 0.0
    %903 = vmatprep.subr.mxu0 0.0
    %904 = vmatpush2.msra.mxu0 0.0
    %905 = vmatprep.subr.mxu0 0.0
    %906 = vmatpush2.msra.mxu0 0.0
    %907 = vmatprep.subr.mxu0 0.0
    %908 = vmatpush2.msra.mxu0 0.0
    %909 = vmatprep.subr.mxu0 0.0
    %910 = vmatpush2.msra.mxu0 0.0
    %911 = vmatprep.subr.mxu0 0.0
    %912 = vmatpush2.msra.mxu0 0.0
    %913 = vmatprep.subr.mxu0 0.0
    %914 = vmatpush2.msra.mxu0 0.0
    %915 = vmatprep.subr.mxu0 0.0
    %916 = vmatpush2.msra.mxu0 0.0
    %917 = vmatprep.subr.mxu0 0.0
    %918 = vmatpush2.msra.mxu0 0.0
    %919 = vmatprep.subr.mxu0 0.0
    %920 = vmatpush2.msra.mxu0 0.0
    %921 = vmatprep.subr.mxu0 0.0
    %922 = vmatpush2.msra.mxu0 0.0
    %923 = vmatprep.subr.mxu0 0.0
    %924 = vmatpush2.msra.mxu0 0.0
    %925 = vmatprep.subr.mxu0 0.0
    %926 = vmatpush2.msra.mxu0 0.0
    %927 = vmatprep.mubr.f32.mxu0 0.0
    %928 = vmatmul.mubr.f32.gmra.mxu0 %v861
    %v929 = vpop.f32.mrf.mxu0
    %v930 = vadd.f32 0.0, %v929
    %v931 = vpop.f32.mrf.mxu0
    %932 = vdwg.mxu0
    %v933 = vadd.f32 %v857, %v930
    %v934 = vtanh.pop %v933
    %v936 = vrot.slane %v789, 3
    %v937 = vsel %vm188, %v936, 0
    %939 = vmatprep.subr.mxu0 0.0
    %940 = vmatpush1.msra.mxu0 0.0
    %941 = vmatprep.subr.mxu0 0.0
    %942 = vmatpush1.msra.mxu0 0.0
    %943 = vmatprep.subr.mxu0 0.0
    %944 = vmatpush1.msra.mxu0 0.0
    %945 = vmatprep.subr.mxu0 0.0
    %946 = vmatpush1.msra.mxu0 0.0
    %947 = vmatprep.subr.mxu0 0.0
    %948 = vmatpush1.msra.mxu0 0.0
    %949 = vmatprep.subr.mxu0 0.0
    %950 = vmatpush1.msra.mxu0 0.0
    %951 = vmatprep.subr.mxu0 0.0
    %952 = vmatpush1.msra.mxu0 0.0
    %953 = vmatprep.subr.mxu0 0.0
    %954 = vmatpush1.msra.mxu0 0.0
    %955 = vmatprep.subr.mxu0 0.0
    %956 = vmatpush1.msra.mxu0 0.0
    %957 = vmatprep.subr.mxu0 0.0
    %958 = vmatpush1.msra.mxu0 0.0
    %959 = vmatprep.subr.mxu0 0.0
    %960 = vmatpush1.msra.mxu0 0.0
    %961 = vmatprep.subr.mxu0 0.0
    %962 = vmatpush1.msra.mxu0 0.0
    %963 = vmatprep.subr.mxu0 0.0
    %964 = vmatpush1.msra.mxu0 %v97
    %965 = vmatprep.subr.mxu0 0.0
    %966 = vmatpush1.msra.mxu0 %v96
    %967 = vmatprep.subr.mxu0 0.0
    %968 = vmatpush1.msra.mxu0 %v95
    %969 = vmatprep.subr.mxu0 0.0
    %970 = vmatpush1.msra.mxu0 %v94
    %971 = vmatprep.subr.mxu0 0.0
    %972 = vmatpush2.msra.mxu0 0.0
    %973 = vmatprep.subr.mxu0 0.0
    %974 = vmatpush2.msra.mxu0 0.0
    %975 = vmatprep.subr.mxu0 0.0
    %976 = vmatpush2.msra.mxu0 0.0
    %977 = vmatprep.subr.mxu0 0.0
    %978 = vmatpush2.msra.mxu0 0.0
    %979 = vmatprep.subr.mxu0 0.0
    %980 = vmatpush2.msra.mxu0 0.0
    %981 = vmatprep.subr.mxu0 0.0
    %982 = vmatpush2.msra.mxu0 0.0
    %983 = vmatprep.subr.mxu0 0.0
    %984 = vmatpush2.msra.mxu0 0.0
    %985 = vmatprep.subr.mxu0 0.0
    %986 = vmatpush2.msra.mxu0 0.0
    %987 = vmatprep.subr.mxu0 0.0
    %988 = vmatpush2.msra.mxu0 0.0
    %989 = vmatprep.subr.mxu0 0.0
    %990 = vmatpush2.msra.mxu0 0.0
    %991 = vmatprep.subr.mxu0 0.0
    %992 = vmatpush2.msra.mxu0 0.0
    %993 = vmatprep.subr.mxu0 0.0
    %994 = vmatpush2.msra.mxu0 0.0
    %995 = vmatprep.subr.mxu0 0.0
    %996 = vmatpush2.msra.mxu0 0.0
    %997 = vmatprep.subr.mxu0 0.0
    %998 = vmatpush2.msra.mxu0 0.0
    %999 = vmatprep.subr.mxu0 0.0
    %1000 = vmatpush2.msra.mxu0 0.0
    %1001 = vmatprep.subr.mxu0 0.0
    %1002 = vmatpush2.msra.mxu0 0.0
    %1003 = vmatprep.mubr.f32.mxu0 0.0
    %1004 = vmatmul.mubr.f32.gmra.mxu0 %v937
    %v1005 = vpop.f32.mrf.mxu0
    %v1006 = vadd.f32 0.0, %v1005
    %v1007 = vpop.f32.mrf.mxu0
    %1008 = vdwg.mxu0
    %v1010 = vrot.slane %v1006, 4
    %v1012 = vadd.f32 %v185, %v1010
    %v1013 = vtanh.pop %v1012
    %1014 = vmatprep.subr.mxu0 0.0
    %1015 = vmatpush1.msra.mxu0 0.0
    %1016 = vmatprep.subr.mxu0 0.0
    %1017 = vmatpush1.msra.mxu0 0.0
    %1018 = vmatprep.subr.mxu0 0.0
    %1019 = vmatpush1.msra.mxu0 0.0
    %1020 = vmatprep.subr.mxu0 0.0
    %1021 = vmatpush1.msra.mxu0 0.0
    %1022 = vmatprep.subr.mxu0 0.0
    %1023 = vmatpush1.msra.mxu0 0.0
    %1024 = vmatprep.subr.mxu0 0.0
    %1025 = vmatpush1.msra.mxu0 0.0
    %1026 = vmatprep.subr.mxu0 0.0
    %1027 = vmatpush1.msra.mxu0 0.0
    %1028 = vmatprep.subr.mxu0 0.0
    %1029 = vmatpush1.msra.mxu0 0.0
    %1030 = vmatprep.subr.mxu0 0.0
    %1031 = vmatpush1.msra.mxu0 0.0
    %1032 = vmatprep.subr.mxu0 0.0
    %1033 = vmatpush1.msra.mxu0 0.0
    %1034 = vmatprep.subr.mxu0 0.0
    %1035 = vmatpush1.msra.mxu0 0.0
    %1036 = vmatprep.subr.mxu0 0.0
    %1037 = vmatpush1.msra.mxu0 0.0
    %1038 = vmatprep.subr.mxu0 0.0
    %1039 = vmatpush1.msra.mxu0 %v106
    %1040 = vmatprep.subr.mxu0 0.0
    %1041 = vmatpush1.msra.mxu0 %v105
    %1042 = vmatprep.subr.mxu0 0.0
    %1043 = vmatpush1.msra.mxu0 %v104
    %1044 = vmatprep.subr.mxu0 0.0
    %1045 = vmatpush1.msra.mxu0 %v103
    %1046 = vmatprep.subr.mxu0 0.0
    %1047 = vmatpush2.msra.mxu0 0.0
    %1048 = vmatprep.subr.mxu0 0.0
    %1049 = vmatpush2.msra.mxu0 0.0
    %1050 = vmatprep.subr.mxu0 0.0
    %1051 = vmatpush2.msra.mxu0 0.0
    %1052 = vmatprep.subr.mxu0 0.0
    %1053 = vmatpush2.msra.mxu0 0.0
    %1054 = vmatprep.subr.mxu0 0.0
    %1055 = vmatpush2.msra.mxu0 0.0
    %1056 = vmatprep.subr.mxu0 0.0
    %1057 = vmatpush2.msra.mxu0 0.0
    %1058 = vmatprep.subr.mxu0 0.0
    %1059 = vmatpush2.msra.mxu0 0.0
    %1060 = vmatprep.subr.mxu0 0.0
    %1061 = vmatpush2.msra.mxu0 0.0
    %1062 = vmatprep.subr.mxu0 0.0
    %1063 = vmatpush2.msra.mxu0 0.0
    %1064 = vmatprep.subr.mxu0 0.0
    %1065 = vmatpush2.msra.mxu0 0.0
    %1066 = vmatprep.subr.mxu0 0.0
    %1067 = vmatpush2.msra.mxu0 0.0
    %1068 = vmatprep.subr.mxu0 0.0
    %1069 = vmatpush2.msra.mxu0 0.0
    %1070 = vmatprep.subr.mxu0 0.0
    %1071 = vmatpush2.msra.mxu0 0.0
    %1072 = vmatprep.subr.mxu0 0.0
    %1073 = vmatpush2.msra.mxu0 0.0
    %1074 = vmatprep.subr.mxu0 0.0
    %1075 = vmatpush2.msra.mxu0 0.0
    %1076 = vmatprep.subr.mxu0 0.0
    %1077 = vmatpush2.msra.mxu0 0.0
    %1078 = vmatprep.mubr.f32.mxu0 0.0
    %1079 = vmatmul.mubr.f32.gmra.mxu0 %v937
    %v1080 = vpop.f32.mrf.mxu0
    %v1081 = vadd.f32 %v343, %v1080
    %v1082 = vpop.f32.mrf.mxu0
    %1083 = vdwg.mxu0
    %v1085 = vsel %vm188, %v934, 0
    %1087 = vmatprep.subr.mxu0 0.0
    %1088 = vmatpush1.msra.mxu0 0.0
    %1089 = vmatprep.subr.mxu0 0.0
    %1090 = vmatpush1.msra.mxu0 0.0
    %1091 = vmatprep.subr.mxu0 0.0
    %1092 = vmatpush1.msra.mxu0 0.0
    %1093 = vmatprep.subr.mxu0 0.0
    %1094 = vmatpush1.msra.mxu0 0.0
    %1095 = vmatprep.subr.mxu0 0.0
    %1096 = vmatpush1.msra.mxu0 0.0
    %1097 = vmatprep.subr.mxu0 0.0
    %1098 = vmatpush1.msra.mxu0 0.0
    %1099 = vmatprep.subr.mxu0 0.0
    %1100 = vmatpush1.msra.mxu0 0.0
    %1101 = vmatprep.subr.mxu0 0.0
    %1102 = vmatpush1.msra.mxu0 0.0
    %1103 = vmatprep.subr.mxu0 0.0
    %1104 = vmatpush1.msra.mxu0 0.0
    %1105 = vmatprep.subr.mxu0 0.0
    %1106 = vmatpush1.msra.mxu0 0.0
    %1107 = vmatprep.subr.mxu0 0.0
    %1108 = vmatpush1.msra.mxu0 0.0
    %1109 = vmatprep.subr.mxu0 0.0
    %1110 = vmatpush1.msra.mxu0 0.0
    %1111 = vmatprep.subr.mxu0 0.0
    %1112 = vmatpush1.msra.mxu0 %v102
    %1113 = vmatprep.subr.mxu0 0.0
    %1114 = vmatpush1.msra.mxu0 %v101
    %1115 = vmatprep.subr.mxu0 0.0
    %1116 = vmatpush1.msra.mxu0 %v100
    %1117 = vmatprep.subr.mxu0 0.0
    %1118 = vmatpush1.msra.mxu0 %v99
    %1119 = vmatprep.subr.mxu0 0.0
    %1120 = vmatpush2.msra.mxu0 0.0
    %1121 = vmatprep.subr.mxu0 0.0
    %1122 = vmatpush2.msra.mxu0 0.0
    %1123 = vmatprep.subr.mxu0 0.0
    %1124 = vmatpush2.msra.mxu0 0.0
    %1125 = vmatprep.subr.mxu0 0.0
    %1126 = vmatpush2.msra.mxu0 0.0
    %1127 = vmatprep.subr.mxu0 0.0
    %1128 = vmatpush2.msra.mxu0 0.0
    %1129 = vmatprep.subr.mxu0 0.0
    %1130 = vmatpush2.msra.mxu0 0.0
    %1131 = vmatprep.subr.mxu0 0.0
    %1132 = vmatpush2.msra.mxu0 0.0
    %1133 = vmatprep.subr.mxu0 0.0
    %1134 = vmatpush2.msra.mxu0 0.0
    %1135 = vmatprep.subr.mxu0 0.0
    %1136 = vmatpush2.msra.mxu0 0.0
    %1137 = vmatprep.subr.mxu0 0.0
    %1138 = vmatpush2.msra.mxu0 0.0
    %1139 = vmatprep.subr.mxu0 0.0
    %1140 = vmatpush2.msra.mxu0 0.0
    %1141 = vmatprep.subr.mxu0 0.0
    %1142 = vmatpush2.msra.mxu0 0.0
    %1143 = vmatprep.subr.mxu0 0.0
    %1144 = vmatpush2.msra.mxu0 0.0
    %1145 = vmatprep.subr.mxu0 0.0
    %1146 = vmatpush2.msra.mxu0 0.0
    %1147 = vmatprep.subr.mxu0 0.0
    %1148 = vmatpush2.msra.mxu0 0.0
    %1149 = vmatprep.subr.mxu0 0.0
    %1150 = vmatpush2.msra.mxu0 0.0
    %1151 = vmatprep.mubr.f32.mxu0 0.0
    %1152 = vmatmul.mubr.f32.gmra.mxu0 %v1085
    %v1153 = vpop.f32.mrf.mxu0
    %v1154 = vadd.f32 0.0, %v1153
    %v1155 = vpop.f32.mrf.mxu0
    %1156 = vdwg.mxu0
    %v1157 = vadd.f32 %v1081, %v1154
    %v1158 = vtanh.pop %v1157
    %v1160 = vrot.slane %v1013, 4
    %v1161 = vsel %vm188, %v1160, 0
    %1163 = vmatprep.subr.mxu0 0.0
    %1164 = vmatpush1.msra.mxu0 0.0
    %1165 = vmatprep.subr.mxu0 0.0
    %1166 = vmatpush1.msra.mxu0 0.0
    %1167 = vmatprep.subr.mxu0 0.0
    %1168 = vmatpush1.msra.mxu0 0.0
    %1169 = vmatprep.subr.mxu0 0.0
    %1170 = vmatpush1.msra.mxu0 0.0
    %1171 = vmatprep.subr.mxu0 0.0
    %1172 = vmatpush1.msra.mxu0 0.0
    %1173 = vmatprep.subr.mxu0 0.0
    %1174 = vmatpush1.msra.mxu0 0.0
    %1175 = vmatprep.subr.mxu0 0.0
    %1176 = vmatpush1.msra.mxu0 0.0
    %1177 = vmatprep.subr.mxu0 0.0
    %1178 = vmatpush1.msra.mxu0 0.0
    %1179 = vmatprep.subr.mxu0 0.0
    %1180 = vmatpush1.msra.mxu0 0.0
    %1181 = vmatprep.subr.mxu0 0.0
    %1182 = vmatpush1.msra.mxu0 0.0
    %1183 = vmatprep.subr.mxu0 0.0
    %1184 = vmatpush1.msra.mxu0 0.0
    %1185 = vmatprep.subr.mxu0 0.0
    %1186 = vmatpush1.msra.mxu0 0.0
    %1187 = vmatprep.subr.mxu0 0.0
    %1188 = vmatpush1.msra.mxu0 %v97
    %1189 = vmatprep.subr.mxu0 0.0
    %1190 = vmatpush1.msra.mxu0 %v96
    %1191 = vmatprep.subr.mxu0 0.0
    %1192 = vmatpush1.msra.mxu0 %v95
    %1193 = vmatprep.subr.mxu0 0.0
    %1194 = vmatpush1.msra.mxu0 %v94
    %1195 = vmatprep.subr.mxu0 0.0
    %1196 = vmatpush2.msra.mxu0 0.0
    %1197 = vmatprep.subr.mxu0 0.0
    %1198 = vmatpush2.msra.mxu0 0.0
    %1199 = vmatprep.subr.mxu0 0.0
    %1200 = vmatpush2.msra.mxu0 0.0
    %1201 = vmatprep.subr.mxu0 0.0
    %1202 = vmatpush2.msra.mxu0 0.0
    %1203 = vmatprep.subr.mxu0 0.0
    %1204 = vmatpush2.msra.mxu0 0.0
    %1205 = vmatprep.subr.mxu0 0.0
    %1206 = vmatpush2.msra.mxu0 0.0
    %1207 = vmatprep.subr.mxu0 0.0
    %1208 = vmatpush2.msra.mxu0 0.0
    %1209 = vmatprep.subr.mxu0 0.0
    %1210 = vmatpush2.msra.mxu0 0.0
    %1211 = vmatprep.subr.mxu0 0.0
    %1212 = vmatpush2.msra.mxu0 0.0
    %1213 = vmatprep.subr.mxu0 0.0
    %1214 = vmatpush2.msra.mxu0 0.0
    %1215 = vmatprep.subr.mxu0 0.0
    %1216 = vmatpush2.msra.mxu0 0.0
    %1217 = vmatprep.subr.mxu0 0.0
    %1218 = vmatpush2.msra.mxu0 0.0
    %1219 = vmatprep.subr.mxu0 0.0
    %1220 = vmatpush2.msra.mxu0 0.0
    %1221 = vmatprep.subr.mxu0 0.0
    %1222 = vmatpush2.msra.mxu0 0.0
    %1223 = vmatprep.subr.mxu0 0.0
    %1224 = vmatpush2.msra.mxu0 0.0
    %1225 = vmatprep.subr.mxu0 0.0
    %1226 = vmatpush2.msra.mxu0 0.0
    %1227 = vmatprep.mubr.f32.mxu0 0.0
    %1228 = vmatmul.mubr.f32.gmra.mxu0 %v1161
    %v1229 = vpop.f32.mrf.mxu0
    %v1230 = vadd.f32 0.0, %v1229
    %v1231 = vpop.f32.mrf.mxu0
    %1232 = vdwg.mxu0
    %v1234 = vrot.slane %v1230, 3
    %v1236 = vadd.f32 %v185, %v1234
    %v1237 = vtanh.pop %v1236
    %1238 = vmatprep.subr.mxu0 0.0
    %1239 = vmatpush1.msra.mxu0 0.0
    %1240 = vmatprep.subr.mxu0 0.0
    %1241 = vmatpush1.msra.mxu0 0.0
    %1242 = vmatprep.subr.mxu0 0.0
    %1243 = vmatpush1.msra.mxu0 0.0
    %1244 = vmatprep.subr.mxu0 0.0
    %1245 = vmatpush1.msra.mxu0 0.0
    %1246 = vmatprep.subr.mxu0 0.0
    %1247 = vmatpush1.msra.mxu0 0.0
    %1248 = vmatprep.subr.mxu0 0.0
    %1249 = vmatpush1.msra.mxu0 0.0
    %1250 = vmatprep.subr.mxu0 0.0
    %1251 = vmatpush1.msra.mxu0 0.0
    %1252 = vmatprep.subr.mxu0 0.0
    %1253 = vmatpush1.msra.mxu0 0.0
    %1254 = vmatprep.subr.mxu0 0.0
    %1255 = vmatpush1.msra.mxu0 0.0
    %1256 = vmatprep.subr.mxu0 0.0
    %1257 = vmatpush1.msra.mxu0 0.0
    %1258 = vmatprep.subr.mxu0 0.0
    %1259 = vmatpush1.msra.mxu0 0.0
    %1260 = vmatprep.subr.mxu0 0.0
    %1261 = vmatpush1.msra.mxu0 0.0
    %1262 = vmatprep.subr.mxu0 0.0
    %1263 = vmatpush1.msra.mxu0 %v106
    %1264 = vmatprep.subr.mxu0 0.0
    %1265 = vmatpush1.msra.mxu0 %v105
    %1266 = vmatprep.subr.mxu0 0.0
    %1267 = vmatpush1.msra.mxu0 %v104
    %1268 = vmatprep.subr.mxu0 0.0
    %1269 = vmatpush1.msra.mxu0 %v103
    %1270 = vmatprep.subr.mxu0 0.0
    %1271 = vmatpush2.msra.mxu0 0.0
    %1272 = vmatprep.subr.mxu0 0.0
    %1273 = vmatpush2.msra.mxu0 0.0
    %1274 = vmatprep.subr.mxu0 0.0
    %1275 = vmatpush2.msra.mxu0 0.0
    %1276 = vmatprep.subr.mxu0 0.0
    %1277 = vmatpush2.msra.mxu0 0.0
    %1278 = vmatprep.subr.mxu0 0.0
    %1279 = vmatpush2.msra.mxu0 0.0
    %1280 = vmatprep.subr.mxu0 0.0
    %1281 = vmatpush2.msra.mxu0 0.0
    %1282 = vmatprep.subr.mxu0 0.0
    %1283 = vmatpush2.msra.mxu0 0.0
    %1284 = vmatprep.subr.mxu0 0.0
    %1285 = vmatpush2.msra.mxu0 0.0
    %1286 = vmatprep.subr.mxu0 0.0
    %1287 = vmatpush2.msra.mxu0 0.0
    %1288 = vmatprep.subr.mxu0 0.0
    %1289 = vmatpush2.msra.mxu0 0.0
    %1290 = vmatprep.subr.mxu0 0.0
    %1291 = vmatpush2.msra.mxu0 0.0
    %1292 = vmatprep.subr.mxu0 0.0
    %1293 = vmatpush2.msra.mxu0 0.0
    %1294 = vmatprep.subr.mxu0 0.0
    %1295 = vmatpush2.msra.mxu0 0.0
    %1296 = vmatprep.subr.mxu0 0.0
    %1297 = vmatpush2.msra.mxu0 0.0
    %1298 = vmatprep.subr.mxu0 0.0
    %1299 = vmatpush2.msra.mxu0 0.0
    %1300 = vmatprep.subr.mxu0 0.0
    %1301 = vmatpush2.msra.mxu0 0.0
    %1302 = vmatprep.mubr.f32.mxu0 0.0
    %1303 = vmatmul.mubr.f32.gmra.mxu0 %v1161
    %v1304 = vpop.f32.mrf.mxu0
    %v1305 = vadd.f32 %v343, %v1304
    %v1306 = vpop.f32.mrf.mxu0
    %1307 = vdwg.mxu0
    %v1309 = vsel %vm188, %v1158, 0
    %1311 = vmatprep.subr.mxu0 0.0
    %1312 = vmatpush1.msra.mxu0 0.0
    %1313 = vmatprep.subr.mxu0 0.0
    %1314 = vmatpush1.msra.mxu0 0.0
    %1315 = vmatprep.subr.mxu0 0.0
    %1316 = vmatpush1.msra.mxu0 0.0
    %1317 = vmatprep.subr.mxu0 0.0
    %1318 = vmatpush1.msra.mxu0 0.0
    %1319 = vmatprep.subr.mxu0 0.0
    %1320 = vmatpush1.msra.mxu0 0.0
    %1321 = vmatprep.subr.mxu0 0.0
    %1322 = vmatpush1.msra.mxu0 0.0
    %1323 = vmatprep.subr.mxu0 0.0
    %1324 = vmatpush1.msra.mxu0 0.0
    %1325 = vmatprep.subr.mxu0 0.0
    %1326 = vmatpush1.msra.mxu0 0.0
    %1327 = vmatprep.subr.mxu0 0.0
    %1328 = vmatpush1.msra.mxu0 0.0
    %1329 = vmatprep.subr.mxu0 0.0
    %1330 = vmatpush1.msra.mxu0 0.0
    %1331 = vmatprep.subr.mxu0 0.0
    %1332 = vmatpush1.msra.mxu0 0.0
    %1333 = vmatprep.subr.mxu0 0.0
    %1334 = vmatpush1.msra.mxu0 0.0
    %1335 = vmatprep.subr.mxu0 0.0
    %1336 = vmatpush1.msra.mxu0 %v102
    %1337 = vmatprep.subr.mxu0 0.0
    %1338 = vmatpush1.msra.mxu0 %v101
    %1339 = vmatprep.subr.mxu0 0.0
    %1340 = vmatpush1.msra.mxu0 %v100
    %1341 = vmatprep.subr.mxu0 0.0
    %1342 = vmatpush1.msra.mxu0 %v99
    %1343 = vmatprep.subr.mxu0 0.0
    %1344 = vmatpush2.msra.mxu0 0.0
    %1345 = vmatprep.subr.mxu0 0.0
    %1346 = vmatpush2.msra.mxu0 0.0
    %1347 = vmatprep.subr.mxu0 0.0
    %1348 = vmatpush2.msra.mxu0 0.0
    %1349 = vmatprep.subr.mxu0 0.0
    %1350 = vmatpush2.msra.mxu0 0.0
    %1351 = vmatprep.subr.mxu0 0.0
    %1352 = vmatpush2.msra.mxu0 0.0
    %1353 = vmatprep.subr.mxu0 0.0
    %1354 = vmatpush2.msra.mxu0 0.0
    %1355 = vmatprep.subr.mxu0 0.0
    %1356 = vmatpush2.msra.mxu0 0.0
    %1357 = vmatprep.subr.mxu0 0.0
    %1358 = vmatpush2.msra.mxu0 0.0
    %1359 = vmatprep.subr.mxu0 0.0
    %1360 = vmatpush2.msra.mxu0 0.0
    %1361 = vmatprep.subr.mxu0 0.0
    %1362 = vmatpush2.msra.mxu0 0.0
    %1363 = vmatprep.subr.mxu0 0.0
    %1364 = vmatpush2.msra.mxu0 0.0
    %1365 = vmatprep.subr.mxu0 0.0
    %1366 = vmatpush2.msra.mxu0 0.0
    %1367 = vmatprep.subr.mxu0 0.0
    %1368 = vmatpush2.msra.mxu0 0.0
    %1369 = vmatprep.subr.mxu0 0.0
    %1370 = vmatpush2.msra.mxu0 0.0
    %1371 = vmatprep.subr.mxu0 0.0
    %1372 = vmatpush2.msra.mxu0 0.0
    %1373 = vmatprep.subr.mxu0 0.0
    %1374 = vmatpush2.msra.mxu0 0.0
    %1375 = vmatprep.mubr.f32.mxu0 0.0
    %1376 = vmatmul.mubr.f32.gmra.mxu0 %v1309
    %v1377 = vpop.f32.mrf.mxu0
    %v1378 = vadd.f32 0.0, %v1377
    %v1379 = vpop.f32.mrf.mxu0
    %1380 = vdwg.mxu0
    %v1381 = vadd.f32 %v1305, %v1378
    %v1382 = vtanh.pop %v1381
    %v1384 = vrot.slane %v1237, 5
    %v1385 = vsel %vm188, %v1384, 0
    %1387 = vmatprep.subr.mxu0 0.0
    %1388 = vmatpush1.msra.mxu0 0.0
    %1389 = vmatprep.subr.mxu0 0.0
    %1390 = vmatpush1.msra.mxu0 0.0
    %1391 = vmatprep.subr.mxu0 0.0
    %1392 = vmatpush1.msra.mxu0 0.0
    %1393 = vmatprep.subr.mxu0 0.0
    %1394 = vmatpush1.msra.mxu0 0.0
    %1395 = vmatprep.subr.mxu0 0.0
    %1396 = vmatpush1.msra.mxu0 0.0
    %1397 = vmatprep.subr.mxu0 0.0
    %1398 = vmatpush1.msra.mxu0 0.0
    %1399 = vmatprep.subr.mxu0 0.0
    %1400 = vmatpush1.msra.mxu0 0.0
    %1401 = vmatprep.subr.mxu0 0.0
    %1402 = vmatpush1.msra.mxu0 0.0
    %1403 = vmatprep.subr.mxu0 0.0
    %1404 = vmatpush1.msra.mxu0 0.0
    %1405 = vmatprep.subr.mxu0 0.0
    %1406 = vmatpush1.msra.mxu0 0.0
    %1407 = vmatprep.subr.mxu0 0.0
    %1408 = vmatpush1.msra.mxu0 0.0
    %1409 = vmatprep.subr.mxu0 0.0
    %1410 = vmatpush1.msra.mxu0 0.0
    %1411 = vmatprep.subr.mxu0 0.0
    %1412 = vmatpush1.msra.mxu0 %v97
    %1413 = vmatprep.subr.mxu0 0.0
    %1414 = vmatpush1.msra.mxu0 %v96
    %1415 = vmatprep.subr.mxu0 0.0
    %1416 = vmatpush1.msra.mxu0 %v95
    %1417 = vmatprep.subr.mxu0 0.0
    %1418 = vmatpush1.msra.mxu0 %v94
    %1419 = vmatprep.subr.mxu0 0.0
    %1420 = vmatpush2.msra.mxu0 0.0
    %1421 = vmatprep.subr.mxu0 0.0
    %1422 = vmatpush2.msra.mxu0 0.0
    %1423 = vmatprep.subr.mxu0 0.0
    %1424 = vmatpush2.msra.mxu0 0.0
    %1425 = vmatprep.subr.mxu0 0.0
    %1426 = vmatpush2.msra.mxu0 0.0
    %1427 = vmatprep.subr.mxu0 0.0
    %1428 = vmatpush2.msra.mxu0 0.0
    %1429 = vmatprep.subr.mxu0 0.0
    %1430 = vmatpush2.msra.mxu0 0.0
    %1431 = vmatprep.subr.mxu0 0.0
    %1432 = vmatpush2.msra.mxu0 0.0
    %1433 = vmatprep.subr.mxu0 0.0
    %1434 = vmatpush2.msra.mxu0 0.0
    %1435 = vmatprep.subr.mxu0 0.0
    %1436 = vmatpush2.msra.mxu0 0.0
    %1437 = vmatprep.subr.mxu0 0.0
    %1438 = vmatpush2.msra.mxu0 0.0
    %1439 = vmatprep.subr.mxu0 0.0
    %1440 = vmatpush2.msra.mxu0 0.0
    %1441 = vmatprep.subr.mxu0 0.0
    %1442 = vmatpush2.msra.mxu0 0.0
    %1443 = vmatprep.subr.mxu0 0.0
    %1444 = vmatpush2.msra.mxu0 0.0
    %1445 = vmatprep.subr.mxu0 0.0
    %1446 = vmatpush2.msra.mxu0 0.0
    %1447 = vmatprep.subr.mxu0 0.0
    %1448 = vmatpush2.msra.mxu0 0.0
    %1449 = vmatprep.subr.mxu0 0.0
    %1450 = vmatpush2.msra.mxu0 0.0
    %1451 = vmatprep.mubr.f32.mxu0 0.0
    %1452 = vmatmul.mubr.f32.gmra.mxu0 %v1385
    %v1453 = vpop.f32.mrf.mxu0
    %v1454 = vadd.f32 0.0, %v1453
    %v1455 = vpop.f32.mrf.mxu0
    %1456 = vdwg.mxu0
    %v1458 = vrot.slane %v1454, 2
    %v1460 = vadd.f32 %v185, %v1458
    %v1461 = vtanh.pop %v1460
    %1462 = vmatprep.subr.mxu0 0.0
    %1463 = vmatpush1.msra.mxu0 0.0
    %1464 = vmatprep.subr.mxu0 0.0
    %1465 = vmatpush1.msra.mxu0 0.0
    %1466 = vmatprep.subr.mxu0 0.0
    %1467 = vmatpush1.msra.mxu0 0.0
    %1468 = vmatprep.subr.mxu0 0.0
    %1469 = vmatpush1.msra.mxu0 0.0
    %1470 = vmatprep.subr.mxu0 0.0
    %1471 = vmatpush1.msra.mxu0 0.0
    %1472 = vmatprep.subr.mxu0 0.0
    %1473 = vmatpush1.msra.mxu0 0.0
    %1474 = vmatprep.subr.mxu0 0.0
    %1475 = vmatpush1.msra.mxu0 0.0
    %1476 = vmatprep.subr.mxu0 0.0
    %1477 = vmatpush1.msra.mxu0 0.0
    %1478 = vmatprep.subr.mxu0 0.0
    %1479 = vmatpush1.msra.mxu0 0.0
    %1480 = vmatprep.subr.mxu0 0.0
    %1481 = vmatpush1.msra.mxu0 0.0
    %1482 = vmatprep.subr.mxu0 0.0
    %1483 = vmatpush1.msra.mxu0 0.0
    %1484 = vmatprep.subr.mxu0 0.0
    %1485 = vmatpush1.msra.mxu0 0.0
    %1486 = vmatprep.subr.mxu0 0.0
    %1487 = vmatpush1.msra.mxu0 %v106
    %1488 = vmatprep.subr.mxu0 0.0
    %1489 = vmatpush1.msra.mxu0 %v105
    %1490 = vmatprep.subr.mxu0 0.0
    %1491 = vmatpush1.msra.mxu0 %v104
    %1492 = vmatprep.subr.mxu0 0.0
    %1493 = vmatpush1.msra.mxu0 %v103
    %1494 = vmatprep.subr.mxu0 0.0
    %1495 = vmatpush2.msra.mxu0 0.0
    %1496 = vmatprep.subr.mxu0 0.0
    %1497 = vmatpush2.msra.mxu0 0.0
    %1498 = vmatprep.subr.mxu0 0.0
    %1499 = vmatpush2.msra.mxu0 0.0
    %1500 = vmatprep.subr.mxu0 0.0
    %1501 = vmatpush2.msra.mxu0 0.0
    %1502 = vmatprep.subr.mxu0 0.0
    %1503 = vmatpush2.msra.mxu0 0.0
    %1504 = vmatprep.subr.mxu0 0.0
    %1505 = vmatpush2.msra.mxu0 0.0
    %1506 = vmatprep.subr.mxu0 0.0
    %1507 = vmatpush2.msra.mxu0 0.0
    %1508 = vmatprep.subr.mxu0 0.0
    %1509 = vmatpush2.msra.mxu0 0.0
    %1510 = vmatprep.subr.mxu0 0.0
    %1511 = vmatpush2.msra.mxu0 0.0
    %1512 = vmatprep.subr.mxu0 0.0
    %1513 = vmatpush2.msra.mxu0 0.0
    %1514 = vmatprep.subr.mxu0 0.0
    %1515 = vmatpush2.msra.mxu0 0.0
    %1516 = vmatprep.subr.mxu0 0.0
    %1517 = vmatpush2.msra.mxu0 0.0
    %1518 = vmatprep.subr.mxu0 0.0
    %1519 = vmatpush2.msra.mxu0 0.0
    %1520 = vmatprep.subr.mxu0 0.0
    %1521 = vmatpush2.msra.mxu0 0.0
    %1522 = vmatprep.subr.mxu0 0.0
    %1523 = vmatpush2.msra.mxu0 0.0
    %1524 = vmatprep.subr.mxu0 0.0
    %1525 = vmatpush2.msra.mxu0 0.0
    %1526 = vmatprep.mubr.f32.mxu0 0.0
    %1527 = vmatmul.mubr.f32.gmra.mxu0 %v1385
    %v1528 = vpop.f32.mrf.mxu0
    %v1529 = vadd.f32 %v343, %v1528
    %v1530 = vpop.f32.mrf.mxu0
    %1531 = vdwg.mxu0
    %v1533 = vsel %vm188, %v1382, 0
    %1535 = vmatprep.subr.mxu0 0.0
    %1536 = vmatpush1.msra.mxu0 0.0
    %1537 = vmatprep.subr.mxu0 0.0
    %1538 = vmatpush1.msra.mxu0 0.0
    %1539 = vmatprep.subr.mxu0 0.0
    %1540 = vmatpush1.msra.mxu0 0.0
    %1541 = vmatprep.subr.mxu0 0.0
    %1542 = vmatpush1.msra.mxu0 0.0
    %1543 = vmatprep.subr.mxu0 0.0
    %1544 = vmatpush1.msra.mxu0 0.0
    %1545 = vmatprep.subr.mxu0 0.0
    %1546 = vmatpush1.msra.mxu0 0.0
    %1547 = vmatprep.subr.mxu0 0.0
    %1548 = vmatpush1.msra.mxu0 0.0
    %1549 = vmatprep.subr.mxu0 0.0
    %1550 = vmatpush1.msra.mxu0 0.0
    %1551 = vmatprep.subr.mxu0 0.0
    %1552 = vmatpush1.msra.mxu0 0.0
    %1553 = vmatprep.subr.mxu0 0.0
    %1554 = vmatpush1.msra.mxu0 0.0
    %1555 = vmatprep.subr.mxu0 0.0
    %1556 = vmatpush1.msra.mxu0 0.0
    %1557 = vmatprep.subr.mxu0 0.0
    %1558 = vmatpush1.msra.mxu0 0.0
    %1559 = vmatprep.subr.mxu0 0.0
    %1560 = vmatpush1.msra.mxu0 %v102
    %1561 = vmatprep.subr.mxu0 0.0
    %1562 = vmatpush1.msra.mxu0 %v101
    %1563 = vmatprep.subr.mxu0 0.0
    %1564 = vmatpush1.msra.mxu0 %v100
    %1565 = vmatprep.subr.mxu0 0.0
    %1566 = vmatpush1.msra.mxu0 %v99
    %1567 = vmatprep.subr.mxu0 0.0
    %1568 = vmatpush2.msra.mxu0 0.0
    %1569 = vmatprep.subr.mxu0 0.0
    %1570 = vmatpush2.msra.mxu0 0.0
    %1571 = vmatprep.subr.mxu0 0.0
    %1572 = vmatpush2.msra.mxu0 0.0
    %1573 = vmatprep.subr.mxu0 0.0
    %1574 = vmatpush2.msra.mxu0 0.0
    %1575 = vmatprep.subr.mxu0 0.0
    %1576 = vmatpush2.msra.mxu0 0.0
    %1577 = vmatprep.subr.mxu0 0.0
    %1578 = vmatpush2.msra.mxu0 0.0
    %1579 = vmatprep.subr.mxu0 0.0
    %1580 = vmatpush2.msra.mxu0 0.0
    %1581 = vmatprep.subr.mxu0 0.0
    %1582 = vmatpush2.msra.mxu0 0.0
    %1583 = vmatprep.subr.mxu0 0.0
    %1584 = vmatpush2.msra.mxu0 0.0
    %1585 = vmatprep.subr.mxu0 0.0
    %1586 = vmatpush2.msra.mxu0 0.0
    %1587 = vmatprep.subr.mxu0 0.0
    %1588 = vmatpush2.msra.mxu0 0.0
    %1589 = vmatprep.subr.mxu0 0.0
    %1590 = vmatpush2.msra.mxu0 0.0
    %1591 = vmatprep.subr.mxu0 0.0
    %1592 = vmatpush2.msra.mxu0 0.0
    %1593 = vmatprep.subr.mxu0 0.0
    %1594 = vmatpush2.msra.mxu0 0.0
    %1595 = vmatprep.subr.mxu0 0.0
    %1596 = vmatpush2.msra.mxu0 0.0
    %1597 = vmatprep.subr.mxu0 0.0
    %1598 = vmatpush2.msra.mxu0 0.0
    %1599 = vmatprep.mubr.f32.mxu0 0.0
    %1600 = vmatmul.mubr.f32.gmra.mxu0 %v1533
    %v1601 = vpop.f32.mrf.mxu0
    %v1602 = vadd.f32 0.0, %v1601
    %v1603 = vpop.f32.mrf.mxu0
    %1604 = vdwg.mxu0
    %v1605 = vadd.f32 %v1529, %v1602
    %v1606 = vtanh.pop %v1605
    %v1608 = vrot.slane %v1461, 6
    %v1609 = vsel %vm188, %v1608, 0
    %1611 = vmatprep.subr.mxu0 0.0
    %1612 = vmatpush1.msra.mxu0 0.0
    %1613 = vmatprep.subr.mxu0 0.0
    %1614 = vmatpush1.msra.mxu0 0.0
    %1615 = vmatprep.subr.mxu0 0.0
    %1616 = vmatpush1.msra.mxu0 0.0
    %1617 = vmatprep.subr.mxu0 0.0
    %1618 = vmatpush1.msra.mxu0 0.0
    %1619 = vmatprep.subr.mxu0 0.0
    %1620 = vmatpush1.msra.mxu0 0.0
    %1621 = vmatprep.subr.mxu0 0.0
    %1622 = vmatpush1.msra.mxu0 0.0
    %1623 = vmatprep.subr.mxu0 0.0
    %1624 = vmatpush1.msra.mxu0 0.0
    %1625 = vmatprep.subr.mxu0 0.0
    %1626 = vmatpush1.msra.mxu0 0.0
    %1627 = vmatprep.subr.mxu0 0.0
    %1628 = vmatpush1.msra.mxu0 0.0
    %1629 = vmatprep.subr.mxu0 0.0
    %1630 = vmatpush1.msra.mxu0 0.0
    %1631 = vmatprep.subr.mxu0 0.0
    %1632 = vmatpush1.msra.mxu0 0.0
    %1633 = vmatprep.subr.mxu0 0.0
    %1634 = vmatpush1.msra.mxu0 0.0
    %1635 = vmatprep.subr.mxu0 0.0
    %1636 = vmatpush1.msra.mxu0 %v97
    %1637 = vmatprep.subr.mxu0 0.0
    %1638 = vmatpush1.msra.mxu0 %v96
    %1639 = vmatprep.subr.mxu0 0.0
    %1640 = vmatpush1.msra.mxu0 %v95
    %1641 = vmatprep.subr.mxu0 0.0
    %1642 = vmatpush1.msra.mxu0 %v94
    %1643 = vmatprep.subr.mxu0 0.0
    %1644 = vmatpush2.msra.mxu0 0.0
    %1645 = vmatprep.subr.mxu0 0.0
    %1646 = vmatpush2.msra.mxu0 0.0
    %1647 = vmatprep.subr.mxu0 0.0
    %1648 = vmatpush2.msra.mxu0 0.0
    %1649 = vmatprep.subr.mxu0 0.0
    %1650 = vmatpush2.msra.mxu0 0.0
    %1651 = vmatprep.subr.mxu0 0.0
    %1652 = vmatpush2.msra.mxu0 0.0
    %1653 = vmatprep.subr.mxu0 0.0
    %1654 = vmatpush2.msra.mxu0 0.0
    %1655 = vmatprep.subr.mxu0 0.0
    %1656 = vmatpush2.msra.mxu0 0.0
    %1657 = vmatprep.subr.mxu0 0.0
    %1658 = vmatpush2.msra.mxu0 0.0
    %1659 = vmatprep.subr.mxu0 0.0
    %1660 = vmatpush2.msra.mxu0 0.0
    %1661 = vmatprep.subr.mxu0 0.0
    %1662 = vmatpush2.msra.mxu0 0.0
    %1663 = vmatprep.subr.mxu0 0.0
    %1664 = vmatpush2.msra.mxu0 0.0
    %1665 = vmatprep.subr.mxu0 0.0
    %1666 = vmatpush2.msra.mxu0 0.0
    %1667 = vmatprep.subr.mxu0 0.0
    %1668 = vmatpush2.msra.mxu0 0.0
    %1669 = vmatprep.subr.mxu0 0.0
    %1670 = vmatpush2.msra.mxu0 0.0
    %1671 = vmatprep.subr.mxu0 0.0
    %1672 = vmatpush2.msra.mxu0 0.0
    %1673 = vmatprep.subr.mxu0 0.0
    %1674 = vmatpush2.msra.mxu0 0.0
    %1675 = vmatprep.mubr.f32.mxu0 0.0
    %1676 = vmatmul.mubr.f32.gmra.mxu0 %v1609
    %v1677 = vpop.f32.mrf.mxu0
    %v1678 = vadd.f32 0.0, %v1677
    %v1679 = vpop.f32.mrf.mxu0
    %1680 = vdwg.mxu0
    %v1682 = vrot.slane %v1678, 1
    %v1684 = vadd.f32 %v185, %v1682
    %v1685 = vtanh.pop %v1684
    %1686 = vmatprep.subr.mxu0 0.0
    %1687 = vmatpush1.msra.mxu0 0.0
    %1688 = vmatprep.subr.mxu0 0.0
    %1689 = vmatpush1.msra.mxu0 0.0
    %1690 = vmatprep.subr.mxu0 0.0
    %1691 = vmatpush1.msra.mxu0 0.0
    %1692 = vmatprep.subr.mxu0 0.0
    %1693 = vmatpush1.msra.mxu0 0.0
    %1694 = vmatprep.subr.mxu0 0.0
    %1695 = vmatpush1.msra.mxu0 0.0
    %1696 = vmatprep.subr.mxu0 0.0
    %1697 = vmatpush1.msra.mxu0 0.0
    %1698 = vmatprep.subr.mxu0 0.0
    %1699 = vmatpush1.msra.mxu0 0.0
    %1700 = vmatprep.subr.mxu0 0.0
    %1701 = vmatpush1.msra.mxu0 0.0
    %1702 = vmatprep.subr.mxu0 0.0
    %1703 = vmatpush1.msra.mxu0 0.0
    %1704 = vmatprep.subr.mxu0 0.0
    %1705 = vmatpush1.msra.mxu0 0.0
    %1706 = vmatprep.subr.mxu0 0.0
    %1707 = vmatpush1.msra.mxu0 0.0
    %1708 = vmatprep.subr.mxu0 0.0
    %1709 = vmatpush1.msra.mxu0 0.0
    %1710 = vmatprep.subr.mxu0 0.0
    %1711 = vmatpush1.msra.mxu0 %v106
    %1712 = vmatprep.subr.mxu0 0.0
    %1713 = vmatpush1.msra.mxu0 %v105
    %1714 = vmatprep.subr.mxu0 0.0
    %1715 = vmatpush1.msra.mxu0 %v104
    %1716 = vmatprep.subr.mxu0 0.0
    %1717 = vmatpush1.msra.mxu0 %v103
    %1718 = vmatprep.subr.mxu0 0.0
    %1719 = vmatpush2.msra.mxu0 0.0
    %1720 = vmatprep.subr.mxu0 0.0
    %1721 = vmatpush2.msra.mxu0 0.0
    %1722 = vmatprep.subr.mxu0 0.0
    %1723 = vmatpush2.msra.mxu0 0.0
    %1724 = vmatprep.subr.mxu0 0.0
    %1725 = vmatpush2.msra.mxu0 0.0
    %1726 = vmatprep.subr.mxu0 0.0
    %1727 = vmatpush2.msra.mxu0 0.0
    %1728 = vmatprep.subr.mxu0 0.0
    %1729 = vmatpush2.msra.mxu0 0.0
    %1730 = vmatprep.subr.mxu0 0.0
    %1731 = vmatpush2.msra.mxu0 0.0
    %1732 = vmatprep.subr.mxu0 0.0
    %1733 = vmatpush2.msra.mxu0 0.0
    %1734 = vmatprep.subr.mxu0 0.0
    %1735 = vmatpush2.msra.mxu0 0.0
    %1736 = vmatprep.subr.mxu0 0.0
    %1737 = vmatpush2.msra.mxu0 0.0
    %1738 = vmatprep.subr.mxu0 0.0
    %1739 = vmatpush2.msra.mxu0 0.0
    %1740 = vmatprep.subr.mxu0 0.0
    %1741 = vmatpush2.msra.mxu0 0.0
    %1742 = vmatprep.subr.mxu0 0.0
    %1743 = vmatpush2.msra.mxu0 0.0
    %1744 = vmatprep.subr.mxu0 0.0
    %1745 = vmatpush2.msra.mxu0 0.0
    %1746 = vmatprep.subr.mxu0 0.0
    %1747 = vmatpush2.msra.mxu0 0.0
    %1748 = vmatprep.subr.mxu0 0.0
    %1749 = vmatpush2.msra.mxu0 0.0
    %1750 = vmatprep.mubr.f32.mxu0 0.0
    %1751 = vmatmul.mubr.f32.gmra.mxu0 %v1609
    %v1752 = vpop.f32.mrf.mxu0
    %v1753 = vadd.f32 %v343, %v1752
    %v1754 = vpop.f32.mrf.mxu0
    %1755 = vdwg.mxu0
    %v1757 = vsel %vm188, %v1606, 0
    %1759 = vmatprep.subr.mxu0 0.0
    %1760 = vmatpush1.msra.mxu0 0.0
    %1761 = vmatprep.subr.mxu0 0.0
    %1762 = vmatpush1.msra.mxu0 0.0
    %1763 = vmatprep.subr.mxu0 0.0
    %1764 = vmatpush1.msra.mxu0 0.0
    %1765 = vmatprep.subr.mxu0 0.0
    %1766 = vmatpush1.msra.mxu0 0.0
    %1767 = vmatprep.subr.mxu0 0.0
    %1768 = vmatpush1.msra.mxu0 0.0
    %1769 = vmatprep.subr.mxu0 0.0
    %1770 = vmatpush1.msra.mxu0 0.0
    %1771 = vmatprep.subr.mxu0 0.0
    %1772 = vmatpush1.msra.mxu0 0.0
    %1773 = vmatprep.subr.mxu0 0.0
    %1774 = vmatpush1.msra.mxu0 0.0
    %1775 = vmatprep.subr.mxu0 0.0
    %1776 = vmatpush1.msra.mxu0 0.0
    %1777 = vmatprep.subr.mxu0 0.0
    %1778 = vmatpush1.msra.mxu0 0.0
    %1779 = vmatprep.subr.mxu0 0.0
    %1780 = vmatpush1.msra.mxu0 0.0
    %1781 = vmatprep.subr.mxu0 0.0
    %1782 = vmatpush1.msra.mxu0 0.0
    %1783 = vmatprep.subr.mxu0 0.0
    %1784 = vmatpush1.msra.mxu0 %v102
    %1785 = vmatprep.subr.mxu0 0.0
    %1786 = vmatpush1.msra.mxu0 %v101
    %1787 = vmatprep.subr.mxu0 0.0
    %1788 = vmatpush1.msra.mxu0 %v100
    %1789 = vmatprep.subr.mxu0 0.0
    %1790 = vmatpush1.msra.mxu0 %v99
    %1791 = vmatprep.subr.mxu0 0.0
    %1792 = vmatpush2.msra.mxu0 0.0
    %1793 = vmatprep.subr.mxu0 0.0
    %1794 = vmatpush2.msra.mxu0 0.0
    %1795 = vmatprep.subr.mxu0 0.0
    %1796 = vmatpush2.msra.mxu0 0.0
    %1797 = vmatprep.subr.mxu0 0.0
    %1798 = vmatpush2.msra.mxu0 0.0
    %1799 = vmatprep.subr.mxu0 0.0
    %1800 = vmatpush2.msra.mxu0 0.0
    %1801 = vmatprep.subr.mxu0 0.0
    %1802 = vmatpush2.msra.mxu0 0.0
    %1803 = vmatprep.subr.mxu0 0.0
    %1804 = vmatpush2.msra.mxu0 0.0
    %1805 = vmatprep.subr.mxu0 0.0
    %1806 = vmatpush2.msra.mxu0 0.0
    %1807 = vmatprep.subr.mxu0 0.0
    %1808 = vmatpush2.msra.mxu0 0.0
    %1809 = vmatprep.subr.mxu0 0.0
    %1810 = vmatpush2.msra.mxu0 0.0
    %1811 = vmatprep.subr.mxu0 0.0
    %1812 = vmatpush2.msra.mxu0 0.0
    %1813 = vmatprep.subr.mxu0 0.0
    %1814 = vmatpush2.msra.mxu0 0.0
    %1815 = vmatprep.subr.mxu0 0.0
    %1816 = vmatpush2.msra.mxu0 0.0
    %1817 = vmatprep.subr.mxu0 0.0
    %1818 = vmatpush2.msra.mxu0 0.0
    %1819 = vmatprep.subr.mxu0 0.0
    %1820 = vmatpush2.msra.mxu0 0.0
    %1821 = vmatprep.subr.mxu0 0.0
    %1822 = vmatpush2.msra.mxu0 0.0
    %1823 = vmatprep.mubr.f32.mxu0 0.0
    %1824 = vmatmul.mubr.f32.gmra.mxu0 %v1757
    %v1825 = vpop.f32.mrf.mxu0
    %v1826 = vadd.f32 0.0, %v1825
    %v1827 = vpop.f32.mrf.mxu0
    %1828 = vdwg.mxu0
    %v1829 = vadd.f32 %v1753, %v1826
    %v1830 = vtanh.pop %v1829
    %v1832 = vrot.slane %v1685, 7
    %v1833 = vsel %vm188, %v1832, 0
    %1835 = vmatprep.subr.mxu0 0.0
    %1836 = vmatpush1.msra.mxu0 0.0
    %1837 = vmatprep.subr.mxu0 0.0
    %1838 = vmatpush1.msra.mxu0 0.0
    %1839 = vmatprep.subr.mxu0 0.0
    %1840 = vmatpush1.msra.mxu0 0.0
    %1841 = vmatprep.subr.mxu0 0.0
    %1842 = vmatpush1.msra.mxu0 0.0
    %1843 = vmatprep.subr.mxu0 0.0
    %1844 = vmatpush1.msra.mxu0 0.0
    %1845 = vmatprep.subr.mxu0 0.0
    %1846 = vmatpush1.msra.mxu0 0.0
    %1847 = vmatprep.subr.mxu0 0.0
    %1848 = vmatpush1.msra.mxu0 0.0
    %1849 = vmatprep.subr.mxu0 0.0
    %1850 = vmatpush1.msra.mxu0 0.0
    %1851 = vmatprep.subr.mxu0 0.0
    %1852 = vmatpush1.msra.mxu0 0.0
    %1853 = vmatprep.subr.mxu0 0.0
    %1854 = vmatpush1.msra.mxu0 0.0
    %1855 = vmatprep.subr.mxu0 0.0
    %1856 = vmatpush1.msra.mxu0 0.0
    %1857 = vmatprep.subr.mxu0 0.0
    %1858 = vmatpush1.msra.mxu0 0.0
    %1859 = vmatprep.subr.mxu0 0.0
    %1860 = vmatpush1.msra.mxu0 %v106
    %1861 = vmatprep.subr.mxu0 0.0
    %1862 = vmatpush1.msra.mxu0 %v105
    %1863 = vmatprep.subr.mxu0 0.0
    %1864 = vmatpush1.msra.mxu0 %v104
    %1865 = vmatprep.subr.mxu0 0.0
    %1866 = vmatpush1.msra.mxu0 %v103
    %1867 = vmatprep.subr.mxu0 0.0
    %1868 = vmatpush2.msra.mxu0 0.0
    %1869 = vmatprep.subr.mxu0 0.0
    %1870 = vmatpush2.msra.mxu0 0.0
    %1871 = vmatprep.subr.mxu0 0.0
    %1872 = vmatpush2.msra.mxu0 0.0
    %1873 = vmatprep.subr.mxu0 0.0
    %1874 = vmatpush2.msra.mxu0 0.0
    %1875 = vmatprep.subr.mxu0 0.0
    %1876 = vmatpush2.msra.mxu0 0.0
    %1877 = vmatprep.subr.mxu0 0.0
    %1878 = vmatpush2.msra.mxu0 0.0
    %1879 = vmatprep.subr.mxu0 0.0
    %1880 = vmatpush2.msra.mxu0 0.0
    %1881 = vmatprep.subr.mxu0 0.0
    %1882 = vmatpush2.msra.mxu0 0.0
    %1883 = vmatprep.subr.mxu0 0.0
    %1884 = vmatpush2.msra.mxu0 0.0
    %1885 = vmatprep.subr.mxu0 0.0
    %1886 = vmatpush2.msra.mxu0 0.0
    %1887 = vmatprep.subr.mxu0 0.0
    %1888 = vmatpush2.msra.mxu0 0.0
    %1889 = vmatprep.subr.mxu0 0.0
    %1890 = vmatpush2.msra.mxu0 0.0
    %1891 = vmatprep.subr.mxu0 0.0
    %1892 = vmatpush2.msra.mxu0 0.0
    %1893 = vmatprep.subr.mxu0 0.0
    %1894 = vmatpush2.msra.mxu0 0.0
    %1895 = vmatprep.subr.mxu0 0.0
    %1896 = vmatpush2.msra.mxu0 0.0
    %1897 = vmatprep.subr.mxu0 0.0
    %1898 = vmatpush2.msra.mxu0 0.0
    %1899 = vmatprep.mubr.f32.mxu0 0.0
    %1900 = vmatmul.mubr.f32.gmra.mxu0 %v1833
    %v1901 = vpop.f32.mrf.mxu0
    %v1902 = vadd.f32 %v343, %v1901
    %v1903 = vpop.f32.mrf.mxu0
    %1904 = vdwg.mxu0
    %v1906 = vsel %vm188, %v1830, 0
    %1908 = vmatprep.subr.mxu0 0.0
    %1909 = vmatpush1.msra.mxu0 0.0
    %1910 = vmatprep.subr.mxu0 0.0
    %1911 = vmatpush1.msra.mxu0 0.0
    %1912 = vmatprep.subr.mxu0 0.0
    %1913 = vmatpush1.msra.mxu0 0.0
    %1914 = vmatprep.subr.mxu0 0.0
    %1915 = vmatpush1.msra.mxu0 0.0
    %1916 = vmatprep.subr.mxu0 0.0
    %1917 = vmatpush1.msra.mxu0 0.0
    %1918 = vmatprep.subr.mxu0 0.0
    %1919 = vmatpush1.msra.mxu0 0.0
    %1920 = vmatprep.subr.mxu0 0.0
    %1921 = vmatpush1.msra.mxu0 0.0
    %1922 = vmatprep.subr.mxu0 0.0
    %1923 = vmatpush1.msra.mxu0 0.0
    %1924 = vmatprep.subr.mxu0 0.0
    %1925 = vmatpush1.msra.mxu0 0.0
    %1926 = vmatprep.subr.mxu0 0.0
    %1927 = vmatpush1.msra.mxu0 0.0
    %1928 = vmatprep.subr.mxu0 0.0
    %1929 = vmatpush1.msra.mxu0 0.0
    %1930 = vmatprep.subr.mxu0 0.0
    %1931 = vmatpush1.msra.mxu0 0.0
    %1932 = vmatprep.subr.mxu0 0.0
    %1933 = vmatpush1.msra.mxu0 %v102
    %1934 = vmatprep.subr.mxu0 0.0
    %1935 = vmatpush1.msra.mxu0 %v101
    %1936 = vmatprep.subr.mxu0 0.0
    %1937 = vmatpush1.msra.mxu0 %v100
    %1938 = vmatprep.subr.mxu0 0.0
    %1939 = vmatpush1.msra.mxu0 %v99
    %1940 = vmatprep.subr.mxu0 0.0
    %1941 = vmatpush2.msra.mxu0 0.0
    %1942 = vmatprep.subr.mxu0 0.0
    %1943 = vmatpush2.msra.mxu0 0.0
    %1944 = vmatprep.subr.mxu0 0.0
    %1945 = vmatpush2.msra.mxu0 0.0
    %1946 = vmatprep.subr.mxu0 0.0
    %1947 = vmatpush2.msra.mxu0 0.0
    %1948 = vmatprep.subr.mxu0 0.0
    %1949 = vmatpush2.msra.mxu0 0.0
    %1950 = vmatprep.subr.mxu0 0.0
    %1951 = vmatpush2.msra.mxu0 0.0
    %1952 = vmatprep.subr.mxu0 0.0
    %1953 = vmatpush2.msra.mxu0 0.0
    %1954 = vmatprep.subr.mxu0 0.0
    %1955 = vmatpush2.msra.mxu0 0.0
    %1956 = vmatprep.subr.mxu0 0.0
    %1957 = vmatpush2.msra.mxu0 0.0
    %1958 = vmatprep.subr.mxu0 0.0
    %1959 = vmatpush2.msra.mxu0 0.0
    %1960 = vmatprep.subr.mxu0 0.0
    %1961 = vmatpush2.msra.mxu0 0.0
    %1962 = vmatprep.subr.mxu0 0.0
    %1963 = vmatpush2.msra.mxu0 0.0
    %1964 = vmatprep.subr.mxu0 0.0
    %1965 = vmatpush2.msra.mxu0 0.0
    %1966 = vmatprep.subr.mxu0 0.0
    %1967 = vmatpush2.msra.mxu0 0.0
    %1968 = vmatprep.subr.mxu0 0.0
    %1969 = vmatpush2.msra.mxu0 0.0
    %1970 = vmatprep.subr.mxu0 0.0
    %1971 = vmatpush2.msra.mxu0 0.0
    %1972 = vmatprep.mubr.f32.mxu0 0.0
    %1973 = vmatmul.mubr.f32.gmra.mxu0 %v1906
    %v1974 = vpop.f32.mrf.mxu0
    %v1975 = vadd.f32 0.0, %v1974
    %v1976 = vpop.f32.mrf.mxu0
    %1977 = vdwg.mxu0
    %v1978 = vadd.f32 %v1902, %v1975
    %v1979 = vtanh.pop %v1978
    %v1980 = vrot.slane %v710, 7
    %v1982 = vrot.slane %v934, 6
    %v1984 = vrot.slane %v1158, 5
    %v1986 = vrot.slane %v1382, 4
    %v1988 = vrot.slane %v1606, 3
    %v1990 = vrot.slane %v1830, 2
    %v1993 = vrot.slane %v1979, 1
    %vm1995 = vcmask 1040384
    %v1996 = vsel %vm1995, %v486, %v1980
    %vm1997 = vcmask 1041408
    %v1998 = vsel %vm1997, %v1996, %v1982
    %vm1999 = vcmask 1042432
    %v2000 = vsel %vm1999, %v1998, %v1984
    %vm2001 = vcmask 1043456
    %v2002 = vsel %vm2001, %v2000, %v1986
    %vm2003 = vcmask 1044480
    %v2004 = vsel %vm2003, %v2002, %v1988
    %vm2005 = vcmask 1045504
    %v2006 = vsel %vm2005, %v2004, %v1990
    %vm2007 = vcmask 1046528
    %v2008 = vsel %vm2007, %v2006, %v1993
    %v2009 = vld [vmem:[#allocation10] sm:$0xff]
    %v2010 = vld [vmem:[#allocation10 + $0x8] sm:$0xff]
    %v2011 = vld [vmem:[#allocation10 + $0x10] sm:$0xff]
    %v2012 = vld [vmem:[#allocation10 + $0x18] sm:$0xff]
    %v2013 = vld [vmem:[%s6] sm:$0x1]
    %v2015 = vlaneseq
    %v2016 = vshrl.u32 %v2015, 7
    %v2017 = vsub.s32 0, %v2016
    %v2018 = vrot.slane %v2013, %v2017
    %v2021 = vsel %vm188, %v2008, 0
    %2023 = vmatprep.subr.mxu0 0.0
    %2024 = vmatpush1.msra.mxu0 0.0
    %2025 = vmatprep.subr.mxu0 0.0
    %2026 = vmatpush1.msra.mxu0 0.0
    %2027 = vmatprep.subr.mxu0 0.0
    %2028 = vmatpush1.msra.mxu0 0.0
    %2029 = vmatprep.subr.mxu0 0.0
    %2030 = vmatpush1.msra.mxu0 0.0
    %2031 = vmatprep.subr.mxu0 0.0
    %2032 = vmatpush1.msra.mxu0 0.0
    %2033 = vmatprep.subr.mxu0 0.0
    %2034 = vmatpush1.msra.mxu0 0.0
    %2035 = vmatprep.subr.mxu0 0.0
    %2036 = vmatpush1.msra.mxu0 0.0
    %2037 = vmatprep.subr.mxu0 0.0
    %2038 = vmatpush1.msra.mxu0 0.0
    %2039 = vmatprep.subr.mxu0 0.0
    %2040 = vmatpush1.msra.mxu0 0.0
    %2041 = vmatprep.subr.mxu0 0.0
    %2042 = vmatpush1.msra.mxu0 0.0
    %2043 = vmatprep.subr.mxu0 0.0
    %2044 = vmatpush1.msra.mxu0 0.0
    %2045 = vmatprep.subr.mxu0 0.0
    %2046 = vmatpush1.msra.mxu0 0.0
    %2047 = vmatprep.subr.mxu0 0.0
    %2048 = vmatpush1.msra.mxu0 %v2012
    %2049 = vmatprep.subr.mxu0 0.0
    %2050 = vmatpush1.msra.mxu0 %v2011
    %2051 = vmatprep.subr.mxu0 0.0
    %2052 = vmatpush1.msra.mxu0 %v2010
    %2053 = vmatprep.subr.mxu0 0.0
    %2054 = vmatpush1.msra.mxu0 %v2009
    %2055 = vmatprep.subr.mxu0 0.0
    %2056 = vmatpush2.msra.mxu0 0.0
    %2057 = vmatprep.subr.mxu0 0.0
    %2058 = vmatpush2.msra.mxu0 0.0
    %2059 = vmatprep.subr.mxu0 0.0
    %2060 = vmatpush2.msra.mxu0 0.0
    %2061 = vmatprep.subr.mxu0 0.0
    %2062 = vmatpush2.msra.mxu0 0.0
    %2063 = vmatprep.subr.mxu0 0.0
    %2064 = vmatpush2.msra.mxu0 0.0
    %2065 = vmatprep.subr.mxu0 0.0
    %2066 = vmatpush2.msra.mxu0 0.0
    %2067 = vmatprep.subr.mxu0 0.0
    %2068 = vmatpush2.msra.mxu0 0.0
    %2069 = vmatprep.subr.mxu0 0.0
    %2070 = vmatpush2.msra.mxu0 0.0
    %2071 = vmatprep.subr.mxu0 0.0
    %2072 = vmatpush2.msra.mxu0 0.0
    %2073 = vmatprep.subr.mxu0 0.0
    %2074 = vmatpush2.msra.mxu0 0.0
    %2075 = vmatprep.subr.mxu0 0.0
    %2076 = vmatpush2.msra.mxu0 0.0
    %2077 = vmatprep.subr.mxu0 0.0
    %2078 = vmatpush2.msra.mxu0 0.0
    %2079 = vmatprep.subr.mxu0 0.0
    %2080 = vmatpush2.msra.mxu0 0.0
    %2081 = vmatprep.subr.mxu0 0.0
    %2082 = vmatpush2.msra.mxu0 0.0
    %2083 = vmatprep.subr.mxu0 0.0
    %2084 = vmatpush2.msra.mxu0 0.0
    %2085 = vmatprep.subr.mxu0 0.0
    %2086 = vmatpush2.msra.mxu0 0.0
    %2087 = vmatprep.mubr.f32.mxu0 0.0
    %2088 = vmatmul.mubr.f32.gmra.mxu0 %v2021
    %v2089 = vpop.f32.mrf.mxu0
    %v2090 = vadd.f32 %v2018, %v2089
    %v2091 = vpop.f32.mrf.mxu0
    %2092 = vdwg.mxu0
    %2093 = vmax.xlane.f32.xlu0 %v2090
    %v2094 = vpop.xlane.xlu0 %2093
    %v2095 = vsub.f32 %v2090, %v2094
    %v2096 = vmul.f32 %v2095, 1.442695
    %v2097 = vpow.pop %v2096
    %2098 = vadd.xlane.f32.xlu0 %v2097
    %v2099 = vpop.xlane.xlu0 %2098
    %v2100 = vlog2.pop %v2099
    %v2101 = vmul.f32 %v2100, 0.6931472
    %v2102 = vsub.f32 %v2095, %v2101
    %2103 = vst [vmem:[#allocation11] sm:$0xff] %v2102
    // Predicated region
    $region50: #{tpu_custom_call.1} parent=1 // pred_check
      _
    $region51: #{tpu_custom_call.1} parent=1 // pred_check_branch
      %2105 = sbr.rel (0) target = $region53
    $region52: #{tpu_custom_call.1} parent=1 // pred_region
      %s2107 = ssub.s32 128, 128
      %2108 = vsyncadd [#allocation4], %s2107
      %s2110 = sshll.u32 [#allocation11], 4
      %s2111 = int_to_ptr.vmem [resolvable:$true] %s2110
      %2113 = dma.vmem_to_hbm [thread:$0]  %s2111, 128, %s7, [#allocation4]
    $region53: #{tpu_custom_call.1} parent=1 // pred_fallthru
      _
    // Predicated region
    $region54: #{tpu_custom_call.1} parent=1 // pred_check
      _
    $region55: #{tpu_custom_call.1} parent=1 // pred_check_branch
      %2115 = sbr.rel (0) target = $region57
    $region56: #{tpu_custom_call.1} parent=1 // pred_region
      %2116 = dma.done [#allocation4], 128
    $region57: #{tpu_custom_call.1} parent=1 // pred_fallthru
      _
    %2117 = vsyncpa [#allocation3], 1
    %2118 = vsyncpa [#allocation6], 1
    %2119 = vsyncpa [#allocation9], 1
    %2120 = vsyncpa [#allocation4], 1

</llo_original>
